<compile_context>
chip_gen: v5e
topology: v5e:2x2
jax: 0.10.0
libtpu: 0.0.40
codegen_flags: <defaults>
</compile_context>

<pallas_src>
import functools

import jax
import jax.numpy as jnp
from jax import lax
from jax.experimental import pallas as pl
from jax.experimental.pallas import tpu as pltpu


def _round_up(x, m):
    return (x + m - 1) // m * m


# --------------------------- fused Pallas kernel ----------------------------

def _conv_gn_relu_kernel(x_ref, w_ref, gamma_ref, beta_ref, gsel_ref,
                         gselt_ref, rmask_ref, o_ref, acc_ref, *,
                         kh_count, owp, inv_count, eps, relu, per_tap_rows,
                         mask_rows):
    """One grid step == one sample.

    x_ref     : stride == 1 -> (1, H*OWp, KW*Cpad) bf16 width-folded activations
                stride >  1 -> (1, KH, M, KW*Cpad) bf16 (rows pre-gathered per kh)
    w_ref     : (KH, KW*Cpad, Opad) bf16  standardized weight, (kw, c)-major rows
    gamma_ref : (1, Opad) f32  GroupNorm scale (ZERO past O -> padded lanes stay 0)
    beta_ref  : (1, Opad) f32  GroupNorm shift (ZERO past O)
    gsel_ref  : (Opad, G) f32  channel -> group one-hot (0 for padded lanes)
    gselt_ref : (G, Opad) f32  group scalar -> per-channel scatter
    rmask_ref : (M, 1)    f32  1.0 where ow < OW (used only when OWp > OW)
    o_ref     : (1, M, Opad)   conv + GroupNorm + ReLU, M = OH*OWp
    acc_ref   : (M, Opad) f32  explicit VMEM accumulator scratch
    """
    m, _ = acc_ref.shape

    # ---- conv: KH matmuls with K = KW*Cpad into the VMEM accumulator --------
    for kh in range(kh_count):
        if per_tap_rows:
            a = x_ref[0, kh, :, :]                       # (M, K) bf16
        else:
            base = kh * owp                              # static, tile-aligned
            a = x_ref[0, base:base + m, :]               # (M, K) bf16
        part = jnp.dot(a, w_ref[kh], preferred_element_type=jnp.float32)
        if kh == 0:
            acc_ref[...] = part
        else:
            acc_ref[...] += part

    acc = acc_ref[...]

    # ---- one-pass GroupNorm stats: sum(x), sum(x^2) -> one (2,Opad)xG dot ----
    am = acc * rmask_ref[...] if mask_rows else acc
    sums = jnp.concatenate(
        [jnp.sum(am, axis=0, keepdims=True),
         jnp.sum(am * am, axis=0, keepdims=True)], axis=0)          # (2, Opad)
    grp = jnp.dot(sums, gsel_ref[...], preferred_element_type=jnp.float32)
    stats = jnp.dot(grp, gselt_ref[...], preferred_element_type=jnp.float32)
    mean = stats[0:1] * inv_count                                    # (1, Opad)
    var = jnp.maximum(stats[1:2] * inv_count - mean * mean, 0.0)
    inv = lax.rsqrt(var + eps)

    y = (acc - mean) * (inv * gamma_ref[...]) + beta_ref[...]
    if relu:
        y = jnp.maximum(y, 0.0)
    o_ref[0] = y.astype(o_ref.dtype)


# --------------------------- module glue ------------------------------------

def _standardize_weight(weight):
    """WeightStandardizedConv2d weight transform (tiny; stays in f32)."""
    O = weight.shape[0]
    w_mean = weight.mean(axis=(1, 2, 3), keepdims=True)
    w = weight - w_mean
    std = jnp.std(w.reshape(O, -1), axis=1, ddof=1).reshape(O, 1, 1, 1) + 1e-5
    return w / std


def conv2d_module_forward(x, params, *, stride, gn_group, relu=True):
    """Equivalent of Conv2d.forward: WS-conv (no bias) -> GroupNorm -> ReLU."""
    weight = params["conv_weight"]
    gamma = params["gn_weight"]
    beta = params["gn_bias"]
    eps = 1e-5

    N, C, H, W = x.shape
    O, Cw, KH, KW = weight.shape
    assert C == Cw
    G = gn_group
    assert O % G == 0
    Cg = O // G
    OH = (H - KH) // stride + 1
    OW = (W - KW) // stride + 1

    Cpad = _round_up(C, 16)                      # bf16 sublane tile for weight K rows
    Kf = KW * Cpad                               # contraction size per kh tap
    OWp = _round_up(OW, 16)                      # kh*OWp tap offsets bf16-tile aligned
    M = OH * OWp                                 # output rows/sample (ow < OW valid)
    align = 256 if O >= 256 else 128             # lane-dense; 256-wide for v6e/v7x MXU
    Opad = _round_up(max(O, 128), align)
    assert M == OH * OWp and OWp >= OW           # padded rows are masked + sliced off

    # --- weight standardization in f32, repack (KH, KW*Cpad, Opad), bf16 ----
    w_std = _standardize_weight(weight)                          # (O, C, KH, KW)
    w_r = jnp.transpose(w_std, (2, 3, 1, 0))                     # (KH, KW, C, O)
    w_r = jnp.pad(w_r, ((0, 0), (0, 0), (0, Cpad - C), (0, Opad - O)))
    w_mat = w_r.reshape(KH, Kf, Opad).astype(jnp.bfloat16)

    # --- activations: NCHW -> NHWC, pad C->Cpad, fold KW (+width stride) into lanes
    xb = jnp.transpose(x, (0, 2, 3, 1)).astype(jnp.bfloat16)     # (N, H, W, C)
    xb = jnp.pad(xb, ((0, 0), (0, 0), (0, 0), (0, Cpad - C)))
    Wneed = (OWp - 1) * stride + KW
    if Wneed > W:
        xb = jnp.pad(xb, ((0, 0), (0, 0), (0, Wneed - W), (0, 0)))
    taps = [xb[:, :, kw:kw + (OWp - 1) * stride + 1:stride, :] for kw in range(KW)]
    xg = jnp.stack(taps, axis=3).reshape(N, H, OWp, Kf)          # (N, H, OWp, KW*Cpad)

    if stride == 1:
        assert OH + KH - 1 == H                  # shifted slices exactly cover H*OWp
        x_in = xg.reshape(N, H * OWp, Kf)
        x_spec = pl.BlockSpec((1, H * OWp, Kf), lambda n: (n, 0, 0))
        per_tap_rows = False
    else:
        # Pre-gather the KH row taps so in-kernel reads stay contiguous/aligned.
        rows = [xg[:, kh:kh + stride * (OH - 1) + 1:stride] for kh in range(KH)]
        x_in = jnp.stack(rows, axis=1).reshape(N, KH, M, Kf)
        x_spec = pl.BlockSpec((1, KH, M, Kf), lambda n: (n, 0, 0, 0))
        per_tap_rows = True

    # --- small constant side inputs (gamma/beta MUST stay zero past O) -------
    gamma_p = jnp.pad(gamma.astype(jnp.float32), (0, Opad - O)).reshape(1, Opad)
    beta_p = jnp.pad(beta.astype(jnp.float32), (0, Opad - O)).reshape(1, Opad)
    ch = jnp.arange(Opad)
    gsel = ((ch[:, None] // Cg == jnp.arange(G)[None, :])
            & (ch[:, None] < O)).astype(jnp.float32)             # (Opad, G)
    gselt = gsel.T                                               # (G, Opad)
    rmask = (jnp.arange(M) % OWp < OW).astype(jnp.float32).reshape(M, 1)

    kernel = functools.partial(
        _conv_gn_relu_kernel, kh_count=KH, owp=OWp,
        inv_count=1.0 / float(OH * OW * Cg), eps=float(eps), relu=bool(relu),
        per_tap_rows=per_tap_rows, mask_rows=(OWp != OW))

    out_dtype = x.dtype   # model dtype; bf16 halves writeback if the model allows
    flops = 2 * N * KH * M * Kf * Opad + 10 * N * M * Opad
    bytes_accessed = (x_in.size * 2 + w_mat.size * 2
                      + N * M * Opad * jnp.dtype(out_dtype).itemsize
                      + (gamma_p.size + beta_p.size + gsel.size * 2
                         + rmask.size) * 4)

    out = pl.pallas_call(
        kernel,
        out_shape=jax.ShapeDtypeStruct((N, M, Opad), out_dtype),
        grid=(N,),
        in_specs=[
            x_spec,
            pl.BlockSpec((KH, Kf, Opad), lambda n: (0, 0, 0)),
            pl.BlockSpec((1, Opad), lambda n: (0, 0)),
            pl.BlockSpec((1, Opad), lambda n: (0, 0)),
            pl.BlockSpec((Opad, G), lambda n: (0, 0)),
            pl.BlockSpec((G, Opad), lambda n: (0, 0)),
            pl.BlockSpec((M, 1), lambda n: (0, 0)),
        ],
        out_specs=pl.BlockSpec((1, M, Opad), lambda n: (n, 0, 0)),
        scratch_shapes=[pltpu.VMEM((M, Opad), jnp.float32)],
        compiler_params=pltpu.CompilerParams(
            dimension_semantics=("parallel",),
            vmem_limit_bytes=56 * 1024 * 1024),
        cost_estimate=pl.CostEstimate(
            flops=int(flops), transcendentals=int(N * Opad),
            bytes_accessed=int(bytes_accessed)),
    )(x_in, w_mat, gamma_p, beta_p, gsel, gselt, rmask)

    # (N, OH*OWp, Opad) -> (N, OH, OW, O) -> NCHW (single small output pass)
    out = out.reshape(N, OH, OWp, Opad)[:, :, :OW, :O]
    return jnp.transpose(out, (0, 3, 1, 2))


def init_params(key, in_channels, out_channels, kernel_size):
    """kaiming_uniform (fan_in, relu) conv weight; GroupNorm affine defaults."""
    fan_in = in_channels * kernel_size * kernel_size
    gain = jnp.sqrt(2.0)                           # nonlinearity='relu'
    bound = gain * jnp.sqrt(3.0 / fan_in)
    w = jax.random.uniform(
        key, (out_channels, in_channels, kernel_size, kernel_size),
        minval=-bound, maxval=bound, dtype=jnp.float32)
    return {
        "conv_weight": w,
        "gn_weight": jnp.ones((out_channels,), jnp.float32),
        "gn_bias": jnp.zeros((out_channels,), jnp.float32),
    }


# --------------------------- reference for sanity ---------------------------

def _reference_forward(x, params, *, stride, gn_group, relu=True):
    w = _standardize_weight(params["conv_weight"])
    # Match the kernel's bf16 MXU operand rounding; all accumulation stays f32.
    xb = x.astype(jnp.bfloat16).astype(jnp.float32)
    wb = w.astype(jnp.bfloat16).astype(jnp.float32)
    y = lax.conv_general_dilated(
        xb, wb, window_strides=(stride, stride), padding="VALID",
        dimension_numbers=("NCHW", "OIHW", "NCHW"),
        precision=lax.Precision.HIGHEST)
    N, C, H, W = y.shape
    g = gn_group
    yg = y.reshape(N, g, (C // g) * H * W)
    mean = yg.mean(axis=-1, keepdims=True)
    var = ((yg - mean) ** 2).mean(axis=-1, keepdims=True)
    yn = ((yg - mean) / jnp.sqrt(var + 1e-5)).reshape(N, C, H, W)
    yn = yn * params["gn_weight"][None, :, None, None] \
            + params["gn_bias"][None, :, None, None]
    if relu:
        yn = jnp.maximum(yn, 0.0)
    return yn


if __name__ == "__main__":
    key = jax.random.PRNGKey(0)
    k_x, k_w = jax.random.split(key)

    in_channels, out_channels, kernel_size, stride, gn_group = 4, 8, 3, 1, 4
    x = jax.random.normal(k_x, (2, in_channels, 16, 16), dtype=jnp.float32)
    params = init_params(k_w, in_channels, out_channels, kernel_size)

    fwd = jax.jit(functools.partial(conv2d_module_forward, stride=stride,
                                    gn_group=gn_group, relu=True))
    out = jax.block_until_ready(fwd(x, params))

    ref = jax.block_until_ready(
        _reference_forward(x, params, stride=stride, gn_group=gn_group,
                           relu=True))

    assert out.shape == (2, out_channels, 14, 14), out.shape
    max_err = float(jnp.max(jnp.abs(out - ref)))
    assert jnp.allclose(out, ref, rtol=2e-3, atol=2e-3), max_err

    print("KERNEL_OK")
</pallas_src>

<mosaic_0001>
module attributes {stable_mosaic.version = 11 : i64} {
  func.func @_conv_gn_relu_kernel(%arg0: i32, %arg1: memref<1x256x48xbf16, #tpu.memory_space<vmem>>, %arg2: memref<3x48x128xbf16, #tpu.memory_space<vmem>>, %arg3: memref<1x128xf32, #tpu.memory_space<vmem>>, %arg4: memref<1x128xf32, #tpu.memory_space<vmem>>, %arg5: memref<128x4xf32, #tpu.memory_space<vmem>>, %arg6: memref<4x128xf32, #tpu.memory_space<vmem>>, %arg7: memref<224x1xf32, #tpu.memory_space<vmem>>, %arg8: memref<1x224x128xf32, #tpu.memory_space<vmem>>, %arg9: memref<224x128xf32, #tpu.memory_space<vmem>>) attributes {dimension_semantics = [#tpu.dimension_semantics<parallel>], iteration_bounds = array<i64: 2>, scalar_prefetch = 0 : i64, scratch_operands = 1 : i64, tpu.core_type = #tpu.core_type<tc>, window_params = [{transform_indices = @transform_0, window_bounds = array<i64: 1, 256, 48>}, {pipeline_mode = #tpu.pipeline_mode<synchronous>, transform_indices = @transform_1, window_bounds = array<i64: 3, 48, 128>}, {pipeline_mode = #tpu.pipeline_mode<synchronous>, transform_indices = @transform_2, window_bounds = array<i64: 1, 128>}, {pipeline_mode = #tpu.pipeline_mode<synchronous>, transform_indices = @transform_3, window_bounds = array<i64: 1, 128>}, {pipeline_mode = #tpu.pipeline_mode<synchronous>, transform_indices = @transform_4, window_bounds = array<i64: 128, 4>}, {pipeline_mode = #tpu.pipeline_mode<synchronous>, transform_indices = @transform_5, window_bounds = array<i64: 4, 128>}, {pipeline_mode = #tpu.pipeline_mode<synchronous>, transform_indices = @transform_6, window_bounds = array<i64: 224, 1>}, {transform_indices = @transform_7, window_bounds = array<i64: 1, 224, 128>}]} {
    %c0 = arith.constant 0 : index
    %c0_0 = arith.constant 0 : index
    %c0_1 = arith.constant 0 : index
    %0 = vector.load %arg1[%c0, %c0_0, %c0_1] : memref<1x256x48xbf16, #tpu.memory_space<vmem>>, vector<1x224x48xbf16>
    %1 = vector.shape_cast %0 : vector<1x224x48xbf16> to vector<224x48xbf16>
    %c0_2 = arith.constant 0 : index
    %c0_3 = arith.constant 0 : index
    %c0_4 = arith.constant 0 : index
    %2 = vector.load %arg2[%c0_2, %c0_3, %c0_4] : memref<3x48x128xbf16, #tpu.memory_space<vmem>>, vector<1x48x128xbf16>
    %3 = vector.shape_cast %2 : vector<1x48x128xbf16> to vector<48x128xbf16>
    %cst = arith.constant dense<0.000000e+00> : vector<224x128xf32>
    %4 = tpu.matmul %1, %3, %cst {dimension_numbers = #tpu.dot_dimension_numbers<[1], [0], [0], [1], [0, 0, 1, 1], [], []>} : vector<224x48xbf16>, vector<48x128xbf16>, vector<224x128xf32> -> vector<224x128xf32>
    %c0_5 = arith.constant 0 : index
    %c0_6 = arith.constant 0 : index
    %5 = vector.load %arg9[%c0_5, %c0_6] : memref<224x128xf32, #tpu.memory_space<vmem>>, vector<224x128xf32>
    tpu.vector_store %arg9[%c0_5, %c0_6], %4 {strides = array<i32>} : memref<224x128xf32, #tpu.memory_space<vmem>>, vector<224x128xf32>,
    %c0_7 = arith.constant 0 : index
    %c16 = arith.constant 16 : index
    %c0_8 = arith.constant 0 : index
    %6 = vector.load %arg1[%c0_7, %c16, %c0_8] : memref<1x256x48xbf16, #tpu.memory_space<vmem>>, vector<1x224x48xbf16>
    %7 = vector.shape_cast %6 : vector<1x224x48xbf16> to vector<224x48xbf16>
    %c1 = arith.constant 1 : index
    %c0_9 = arith.constant 0 : index
    %c0_10 = arith.constant 0 : index
    %8 = vector.load %arg2[%c1, %c0_9, %c0_10] : memref<3x48x128xbf16, #tpu.memory_space<vmem>>, vector<1x48x128xbf16>
    %9 = vector.shape_cast %8 : vector<1x48x128xbf16> to vector<48x128xbf16>
    %cst_11 = arith.constant dense<0.000000e+00> : vector<224x128xf32>
    %10 = tpu.matmul %7, %9, %cst_11 {dimension_numbers = #tpu.dot_dimension_numbers<[1], [0], [0], [1], [0, 0, 1, 1], [], []>} : vector<224x48xbf16>, vector<48x128xbf16>, vector<224x128xf32> -> vector<224x128xf32>
    %c0_12 = arith.constant 0 : index
    %c0_13 = arith.constant 0 : index
    %11 = vector.load %arg9[%c0_12, %c0_13] : memref<224x128xf32, #tpu.memory_space<vmem>>, vector<224x128xf32>
    %12 = arith.addf %11, %10 : vector<224x128xf32>
    %c0_14 = arith.constant 0 : index
    %c0_15 = arith.constant 0 : index
    %13 = vector.load %arg9[%c0_14, %c0_15] : memref<224x128xf32, #tpu.memory_space<vmem>>, vector<224x128xf32>
    tpu.vector_store %arg9[%c0_14, %c0_15], %12 {strides = array<i32>} : memref<224x128xf32, #tpu.memory_space<vmem>>, vector<224x128xf32>,
    %c0_16 = arith.constant 0 : index
    %c32 = arith.constant 32 : index
    %c0_17 = arith.constant 0 : index
    %14 = vector.load %arg1[%c0_16, %c32, %c0_17] : memref<1x256x48xbf16, #tpu.memory_space<vmem>>, vector<1x224x48xbf16>
    %15 = vector.shape_cast %14 : vector<1x224x48xbf16> to vector<224x48xbf16>
    %c2 = arith.constant 2 : index
    %c0_18 = arith.constant 0 : index
    %c0_19 = arith.constant 0 : index
    %16 = vector.load %arg2[%c2, %c0_18, %c0_19] : memref<3x48x128xbf16, #tpu.memory_space<vmem>>, vector<1x48x128xbf16>
    %17 = vector.shape_cast %16 : vector<1x48x128xbf16> to vector<48x128xbf16>
    %cst_20 = arith.constant dense<0.000000e+00> : vector<224x128xf32>
    %18 = tpu.matmul %15, %17, %cst_20 {dimension_numbers = #tpu.dot_dimension_numbers<[1], [0], [0], [1], [0, 0, 1, 1], [], []>} : vector<224x48xbf16>, vector<48x128xbf16>, vector<224x128xf32> -> vector<224x128xf32>
    %c0_21 = arith.constant 0 : index
    %c0_22 = arith.constant 0 : index
    %19 = vector.load %arg9[%c0_21, %c0_22] : memref<224x128xf32, #tpu.memory_space<vmem>>, vector<224x128xf32>
    %20 = arith.addf %19, %18 : vector<224x128xf32>
    %c0_23 = arith.constant 0 : index
    %c0_24 = arith.constant 0 : index
    %21 = vector.load %arg9[%c0_23, %c0_24] : memref<224x128xf32, #tpu.memory_space<vmem>>, vector<224x128xf32>
    tpu.vector_store %arg9[%c0_23, %c0_24], %20 {strides = array<i32>} : memref<224x128xf32, #tpu.memory_space<vmem>>, vector<224x128xf32>,
    %c0_25 = arith.constant 0 : index
    %c0_26 = arith.constant 0 : index
    %22 = vector.load %arg9[%c0_25, %c0_26] : memref<224x128xf32, #tpu.memory_space<vmem>>, vector<224x128xf32>
    %c0_27 = arith.constant 0 : index
    %c0_28 = arith.constant 0 : index
    %23 = vector.load %arg7[%c0_27, %c0_28] : memref<224x1xf32, #tpu.memory_space<vmem>>, vector<224x1xf32>
    %24 = vector.broadcast %23 : vector<224x1xf32> to vector<224x128xf32>
    %25 = arith.mulf %22, %24 : vector<224x128xf32>
    %cst_29 = arith.constant dense<0.000000e+00> : vector<128xf32>
    %26 = vector.multi_reduction <add>, %25, %cst_29 [0] : vector<224x128xf32> to vector<128xf32>
    %27 = vector.shape_cast %26 : vector<128xf32> to vector<1x128xf32>
    %28 = arith.mulf %25, %25 : vector<224x128xf32>
    %cst_30 = arith.constant dense<0.000000e+00> : vector<128xf32>
    %29 = vector.multi_reduction <add>, %28, %cst_30 [0] : vector<224x128xf32> to vector<128xf32>
    %30 = vector.shape_cast %29 : vector<128xf32> to vector<1x128xf32>
    %31 = tpu.concatenate %27, %30 in 0 : vector<1x128xf32>, vector<1x128xf32> -> vector<2x128xf32>
    %c0_31 = arith.constant 0 : index
    %c0_32 = arith.constant 0 : index
    %32 = vector.load %arg5[%c0_31, %c0_32] : memref<128x4xf32, #tpu.memory_space<vmem>>, vector<128x4xf32>
    %cst_33 = arith.constant dense<0.000000e+00> : vector<2x4xf32>
    %33 = tpu.matmul %31, %32, %cst_33 {dimension_numbers = #tpu.dot_dimension_numbers<[1], [0], [0], [1], [0, 0, 1, 1], [], []>} : vector<2x128xf32>, vector<128x4xf32>, vector<2x4xf32> -> vector<2x4xf32>
    %c0_34 = arith.constant 0 : index
    %c0_35 = arith.constant 0 : index
    %34 = vector.load %arg6[%c0_34, %c0_35] : memref<4x128xf32, #tpu.memory_space<vmem>>, vector<4x128xf32>
    %cst_36 = arith.constant dense<0.000000e+00> : vector<2x128xf32>
    %35 = tpu.matmul %33, %34, %cst_36 {dimension_numbers = #tpu.dot_dimension_numbers<[1], [0], [0], [1], [0, 0, 1, 1], [], []>} : vector<2x4xf32>, vector<4x128xf32>, vector<2x128xf32> -> vector<2x128xf32>
    %36 = vector.extract_strided_slice %35 {offsets = [0, 0], sizes = [1, 128], strides = [1, 1]} : vector<2x128xf32> to vector<1x128xf32>
    %cst_37 = arith.constant 0.00255102036 : f32
    %37 = vector.broadcast %cst_37 : f32 to vector<1x128xf32>
    %38 = arith.mulf %36, %37 : vector<1x128xf32>
    %39 = vector.extract_strided_slice %35 {offsets = [1, 0], sizes = [1, 128], strides = [1, 1]} : vector<2x128xf32> to vector<1x128xf32>
    %cst_38 = arith.constant 0.00255102036 : f32
    %40 = vector.broadcast %cst_38 : f32 to vector<1x128xf32>
    %41 = arith.mulf %39, %40 : vector<1x128xf32>
    %42 = arith.mulf %38, %38 : vector<1x128xf32>
    %43 = arith.subf %41, %42 : vector<1x128xf32>
    %cst_39 = arith.constant 0.000000e+00 : f32
    %44 = vector.broadcast %cst_39 : f32 to vector<1x128xf32>
    %45 = arith.maximumf %43, %44 : vector<1x128xf32>
    %cst_40 = arith.constant 9.99999974E-6 : f32
    %46 = vector.broadcast %cst_40 : f32 to vector<1x128xf32>
    %47 = arith.addf %45, %46 : vector<1x128xf32>
    %48 = math.rsqrt %47 : vector<1x128xf32>
    %49 = vector.broadcast %38 : vector<1x128xf32> to vector<224x128xf32>
    %50 = arith.subf %22, %49 : vector<224x128xf32>
    %c0_41 = arith.constant 0 : index
    %c0_42 = arith.constant 0 : index
    %51 = vector.load %arg3[%c0_41, %c0_42] : memref<1x128xf32, #tpu.memory_space<vmem>>, vector<1x128xf32>
    %52 = arith.mulf %48, %51 : vector<1x128xf32>
    %53 = vector.broadcast %52 : vector<1x128xf32> to vector<224x128xf32>
    %54 = arith.mulf %50, %53 : vector<224x128xf32>
    %c0_43 = arith.constant 0 : index
    %c0_44 = arith.constant 0 : index
    %55 = vector.load %arg4[%c0_43, %c0_44] : memref<1x128xf32, #tpu.memory_space<vmem>>, vector<1x128xf32>
    %56 = vector.broadcast %55 : vector<1x128xf32> to vector<224x128xf32>
    %57 = arith.addf %54, %56 : vector<224x128xf32>
    %cst_45 = arith.constant 0.000000e+00 : f32
    %58 = vector.broadcast %cst_45 : f32 to vector<224x128xf32>
    %59 = arith.maximumf %57, %58 : vector<224x128xf32>
    %c0_46 = arith.constant 0 : index
    %c0_47 = arith.constant 0 : index
    %c0_48 = arith.constant 0 : index
    %60 = vector.load %arg8[%c0_46, %c0_47, %c0_48] : memref<1x224x128xf32, #tpu.memory_space<vmem>>, vector<1x224x128xf32>
    %61 = vector.shape_cast %60 : vector<1x224x128xf32> to vector<224x128xf32>
    %62 = vector.shape_cast %59 : vector<224x128xf32> to vector<1x224x128xf32>
    tpu.vector_store %arg8[%c0_46, %c0_47, %c0_48], %62 {strides = array<i32>} : memref<1x224x128xf32, #tpu.memory_space<vmem>>, vector<1x224x128xf32>,
    return
  }
  func.func @transform_0(%arg0: i32) -> (i32, i32, i32) {
    %c0_i32 = arith.constant 0 : i32
    %c0_i32_0 = arith.constant 0 : i32
    %c0_i32_1 = arith.constant 0 : i32
    return %arg0, %c0_i32, %c0_i32_0 : i32, i32, i32
  }
  func.func @transform_1(%arg0: i32) -> (i32, i32, i32) {
    %c0_i32 = arith.constant 0 : i32
    %c0_i32_0 = arith.constant 0 : i32
    %c0_i32_1 = arith.constant 0 : i32
    %c0_i32_2 = arith.constant 0 : i32
    return %c0_i32, %c0_i32_0, %c0_i32_1 : i32, i32, i32
  }
  func.func @transform_2(%arg0: i32) -> (i32, i32) {
    %c0_i32 = arith.constant 0 : i32
    %c0_i32_0 = arith.constant 0 : i32
    %c0_i32_1 = arith.constant 0 : i32
    return %c0_i32, %c0_i32_0 : i32, i32
  }
  func.func @transform_3(%arg0: i32) -> (i32, i32) {
    %c0_i32 = arith.constant 0 : i32
    %c0_i32_0 = arith.constant 0 : i32
    %c0_i32_1 = arith.constant 0 : i32
    return %c0_i32, %c0_i32_0 : i32, i32
  }
  func.func @transform_4(%arg0: i32) -> (i32, i32) {
    %c0_i32 = arith.constant 0 : i32
    %c0_i32_0 = arith.constant 0 : i32
    %c0_i32_1 = arith.constant 0 : i32
    return %c0_i32, %c0_i32_0 : i32, i32
  }
  func.func @transform_5(%arg0: i32) -> (i32, i32) {
    %c0_i32 = arith.constant 0 : i32
    %c0_i32_0 = arith.constant 0 : i32
    %c0_i32_1 = arith.constant 0 : i32
    return %c0_i32, %c0_i32_0 : i32, i32
  }
  func.func @transform_6(%arg0: i32) -> (i32, i32) {
    %c0_i32 = arith.constant 0 : i32
    %c0_i32_0 = arith.constant 0 : i32
    %c0_i32_1 = arith.constant 0 : i32
    return %c0_i32, %c0_i32_0 : i32, i32
  }
  func.func @transform_7(%arg0: i32) -> (i32, i32, i32) {
    %c0_i32 = arith.constant 0 : i32
    %c0_i32_0 = arith.constant 0 : i32
    %c0_i32_1 = arith.constant 0 : i32
    return %arg0, %c0_i32, %c0_i32_0 : i32, i32, i32
  }
}

</mosaic_0001>

<llo_original>
// kernel: conv2d_module_forward.1
$region0: #{conv2d_module_forward.1}
  #allocation0 [shape = 'u32[]', space=smem, size = 0x4, offset = 0x4, fixed_abs, tag = 'smem constant byte address 0x4 - core index']
  #allocation1 [shape = 'u32[72,128]{1,0:T(1,128)}', space=vmem, size = 0x9000, scoped, tag = 'internal scratch']
  #allocation2 [shape = 'f32[224,128]{1,0:T(8,128)}', space=vmem, size = 0x1c000, scoped, tag = 'scratch operand']
  %s0 = inlined_call_operand.vmem [shape: bf16[2,256,48], index: 0, kind: input, shape index: {}]
  %s1 = inlined_call_operand.vmem [shape: bf16[3,48,128], index: 1, kind: input, shape index: {}]
  %s2 = inlined_call_operand.vmem [shape: f32[1,128], index: 2, kind: input, shape index: {}]
  %s3 = inlined_call_operand.vmem [shape: f32[1,128], index: 3, kind: input, shape index: {}]
  %s4 = inlined_call_operand.vmem [shape: f32[128,4], index: 4, kind: input, shape index: {}]
  %s5 = inlined_call_operand.vmem [shape: f32[4,128], index: 5, kind: input, shape index: {}]
  %s6 = inlined_call_operand.vmem [shape: f32[224,1], index: 6, kind: input, shape index: {}]
  %s7 = inlined_call_operand.vmem [shape: f32[2,224,128], index: 7, kind: output, shape index: {}]
  %s8 = sld [smem:[#allocation0]]
  $region61: #{conv2d_module_forward.1} parent=0
    _
  %s10 = ssub.s32 1, %s8
  %s11 = scalar_select 0, %s10, %s8
  loop: start=0, step=1, limit=4
  $region2: #{conv2d_module_forward.1} parent=0 // loop_pre_header
    _
  $region3: #{conv2d_module_forward.1} parent=0 // loop_header
    %s13 = sphi 0, %s17
    %p14 = scmp.ge.s32.totalorder %s13, 4
    %s23 = sphi 0, %s25
    %s26 = sphi 0, %s23
    %s27 = sphi 0, %s26
    %s43 = sphi 0, %s27
    %s47 = sphi 0, %s47
    %s49 = sphi 0, %s47
    %s50 = sphi 0, %s49
    %s64 = sphi 0, %s50
    %s68 = sphi 0, %s68
    %s70 = sphi 0, %s68
    %s71 = sphi 0, %s70
    %s85 = sphi 0, %s71
    %s89 = sphi 0, %s89
    %s91 = sphi 0, %s89
    %s92 = sphi 0, %s91
    %s106 = sphi 0, %s92
    %s110 = sphi 0, %s110
    %s112 = sphi 0, %s110
    %s113 = sphi 0, %s112
    %s127 = sphi 0, %s113
    %s131 = sphi 0, %s131
    %s133 = sphi 0, %s131
    %s134 = sphi 0, %s133
    %s148 = sphi 0, %s134
    %s152 = sphi 0, %s152
    %s154 = sphi 0, %s152
    %s155 = sphi 0, %s154
    %s169 = sphi 0, %s155
    %s175 = sphi 0, %s177
    %s178 = sphi 0, %s175
    %s179 = sphi 0, %s178
    %s195 = sphi 0, %s179
  $region4: #{conv2d_module_forward.1} parent=0 // loop_header_branch
    %16 = sbr.rel (%p14) target = $region8
  $region5: #{conv2d_module_forward.1} parent=0 // loop_body
    %s18 = ssub.s32 %s13, 1
    %s19 = ssub.s32 %s13, 2
    %s20 = sadd.s32 %s13, 1
    %s21 = ssub.s32 %s13, %s20
    %p22 = scmp.eq.s32.totalorder %s21, 0
    %s24 = sadd.s32 %s23, 1
    %s25 = scalar_select %p22, %s23, %s24
    %p28 = pneg %p22
    %p29 = scmp.eq.s32.totalorder %s13, 1
    %p30 = por %p28, %p29
    %p31 = scmp.ne.s32.totalorder %s23, %s26
    %p32 = scmp.eq.s32.totalorder %s13, 0
    %p33 = por %p31, %p32
    %p34 = scmp.ne.s32.totalorder %s23, %s26
    %p35 = scmp.eq.s32.totalorder %s18, 1
    %p36 = por %p34, %p35
    %p37 = scmp.ne.s32.totalorder %s26, %s27
    %p38 = scmp.eq.s32.totalorder %s18, 0
    %p39 = por %p37, %p38
    %p40 = scmp.ne.s32.totalorder %s26, %s27
    %p41 = scmp.eq.s32.totalorder %s19, 1
    %p42 = por %p40, %p41
    %p44 = scmp.ne.s32.totalorder %s27, %s43
    %p45 = scmp.eq.s32.totalorder %s19, 0
    %p46 = por %p44, %p45
    %s48 = sadd.s32 %s47, 1
    %p51 = scmp.eq.s32.totalorder %s13, 1
    %p52 = scmp.ne.s32.totalorder %s47, %s49
    %p53 = scmp.eq.s32.totalorder %s13, 0
    %p54 = por %p52, %p53
    %p55 = scmp.ne.s32.totalorder %s47, %s49
    %p56 = scmp.eq.s32.totalorder %s18, 1
    %p57 = por %p55, %p56
    %p58 = scmp.ne.s32.totalorder %s49, %s50
    %p59 = scmp.eq.s32.totalorder %s18, 0
    %p60 = por %p58, %p59
    %p61 = scmp.ne.s32.totalorder %s49, %s50
    %p62 = scmp.eq.s32.totalorder %s19, 1
    %p63 = por %p61, %p62
    %p65 = scmp.ne.s32.totalorder %s50, %s64
    %p66 = scmp.eq.s32.totalorder %s19, 0
    %p67 = por %p65, %p66
    %s69 = sadd.s32 %s68, 1
    %p72 = scmp.eq.s32.totalorder %s13, 1
    %p73 = scmp.ne.s32.totalorder %s68, %s70
    %p74 = scmp.eq.s32.totalorder %s13, 0
    %p75 = por %p73, %p74
    %p76 = scmp.ne.s32.totalorder %s68, %s70
    %p77 = scmp.eq.s32.totalorder %s18, 1
    %p78 = por %p76, %p77
    %p79 = scmp.ne.s32.totalorder %s70, %s71
    %p80 = scmp.eq.s32.totalorder %s18, 0
    %p81 = por %p79, %p80
    %p82 = scmp.ne.s32.totalorder %s70, %s71
    %p83 = scmp.eq.s32.totalorder %s19, 1
    %p84 = por %p82, %p83
    %p86 = scmp.ne.s32.totalorder %s71, %s85
    %p87 = scmp.eq.s32.totalorder %s19, 0
    %p88 = por %p86, %p87
    %s90 = sadd.s32 %s89, 1
    %p93 = scmp.eq.s32.totalorder %s13, 1
    %p94 = scmp.ne.s32.totalorder %s89, %s91
    %p95 = scmp.eq.s32.totalorder %s13, 0
    %p96 = por %p94, %p95
    %p97 = scmp.ne.s32.totalorder %s89, %s91
    %p98 = scmp.eq.s32.totalorder %s18, 1
    %p99 = por %p97, %p98
    %p100 = scmp.ne.s32.totalorder %s91, %s92
    %p101 = scmp.eq.s32.totalorder %s18, 0
    %p102 = por %p100, %p101
    %p103 = scmp.ne.s32.totalorder %s91, %s92
    %p104 = scmp.eq.s32.totalorder %s19, 1
    %p105 = por %p103, %p104
    %p107 = scmp.ne.s32.totalorder %s92, %s106
    %p108 = scmp.eq.s32.totalorder %s19, 0
    %p109 = por %p107, %p108
    %s111 = sadd.s32 %s110, 1
    %p114 = scmp.eq.s32.totalorder %s13, 1
    %p115 = scmp.ne.s32.totalorder %s110, %s112
    %p116 = scmp.eq.s32.totalorder %s13, 0
    %p117 = por %p115, %p116
    %p118 = scmp.ne.s32.totalorder %s110, %s112
    %p119 = scmp.eq.s32.totalorder %s18, 1
    %p120 = por %p118, %p119
    %p121 = scmp.ne.s32.totalorder %s112, %s113
    %p122 = scmp.eq.s32.totalorder %s18, 0
    %p123 = por %p121, %p122
    %p124 = scmp.ne.s32.totalorder %s112, %s113
    %p125 = scmp.eq.s32.totalorder %s19, 1
    %p126 = por %p124, %p125
    %p128 = scmp.ne.s32.totalorder %s113, %s127
    %p129 = scmp.eq.s32.totalorder %s19, 0
    %p130 = por %p128, %p129
    %s132 = sadd.s32 %s131, 1
    %p135 = scmp.eq.s32.totalorder %s13, 1
    %p136 = scmp.ne.s32.totalorder %s131, %s133
    %p137 = scmp.eq.s32.totalorder %s13, 0
    %p138 = por %p136, %p137
    %p139 = scmp.ne.s32.totalorder %s131, %s133
    %p140 = scmp.eq.s32.totalorder %s18, 1
    %p141 = por %p139, %p140
    %p142 = scmp.ne.s32.totalorder %s133, %s134
    %p143 = scmp.eq.s32.totalorder %s18, 0
    %p144 = por %p142, %p143
    %p145 = scmp.ne.s32.totalorder %s133, %s134
    %p146 = scmp.eq.s32.totalorder %s19, 1
    %p147 = por %p145, %p146
    %p149 = scmp.ne.s32.totalorder %s134, %s148
    %p150 = scmp.eq.s32.totalorder %s19, 0
    %p151 = por %p149, %p150
    %s153 = sadd.s32 %s152, 1
    %p156 = scmp.eq.s32.totalorder %s13, 1
    %p157 = scmp.ne.s32.totalorder %s152, %s154
    %p158 = scmp.eq.s32.totalorder %s13, 0
    %p159 = por %p157, %p158
    %p160 = scmp.ne.s32.totalorder %s152, %s154
    %p161 = scmp.eq.s32.totalorder %s18, 1
    %p162 = por %p160, %p161
    %p163 = scmp.ne.s32.totalorder %s154, %s155
    %p164 = scmp.eq.s32.totalorder %s18, 0
    %p165 = por %p163, %p164
    %p166 = scmp.ne.s32.totalorder %s154, %s155
    %p167 = scmp.eq.s32.totalorder %s19, 1
    %p168 = por %p166, %p167
    %p170 = scmp.ne.s32.totalorder %s155, %s169
    %p171 = scmp.eq.s32.totalorder %s19, 0
    %p172 = por %p170, %p171
    %s173 = ssub.s32 %s13, %s20
    %p174 = scmp.eq.s32.totalorder %s173, 0
    %s176 = sadd.s32 %s175, 1
    %s177 = scalar_select %p174, %s175, %s176
    %p180 = pneg %p174
    %p181 = scmp.eq.s32.totalorder %s13, 1
    %p182 = por %p180, %p181
    %p183 = scmp.ne.s32.totalorder %s175, %s178
    %p184 = scmp.eq.s32.totalorder %s13, 0
    %p185 = por %p183, %p184
    %p186 = scmp.ne.s32.totalorder %s175, %s178
    %p187 = scmp.eq.s32.totalorder %s18, 1
    %p188 = por %p186, %p187
    %p189 = scmp.ne.s32.totalorder %s178, %s179
    %p190 = scmp.eq.s32.totalorder %s18, 0
    %p191 = por %p189, %p190
    %p192 = scmp.ne.s32.totalorder %s178, %s179
    %p193 = scmp.eq.s32.totalorder %s19, 1
    %p194 = por %p192, %p193
    %p196 = scmp.ne.s32.totalorder %s179, %s195
    %p197 = scmp.eq.s32.totalorder %s19, 0
    %p198 = por %p196, %p197
    %p199 = scmp.le.s32.totalorder 1, %s13
    %p200 = scmp.lt.s32.totalorder %s13, 3
    %p201 = pnand %p199, %p200
    %p202 = pneg %p201
    // Predicated region
    $region9: #{conv2d_module_forward.1} parent=5 // pred_check
      _
    $region10: #{conv2d_module_forward.1} parent=5 // pred_check_branch
      %204 = sbr.rel (%p201) target = $region12
    $region11: #{conv2d_module_forward.1} parent=5 // pred_region
      %s205 = ssub.s32 %s13, 1
      // Predicated region
      $region13: #{conv2d_module_forward.1} parent=11 // pred_check
        %p206 = pneg %p60
      $region14: #{conv2d_module_forward.1} parent=11 // pred_check_branch
        %208 = sbr.rel (%p206) target = $region16
      $region15: #{conv2d_module_forward.1} parent=11 // pred_region
        _
      $region16: #{conv2d_module_forward.1} parent=11 // pred_fallthru
        _
      // Predicated region
      $region17: #{conv2d_module_forward.1} parent=11 // pred_check
        %p209 = pneg %p81
      $region18: #{conv2d_module_forward.1} parent=11 // pred_check_branch
        %211 = sbr.rel (%p209) target = $region20
      $region19: #{conv2d_module_forward.1} parent=11 // pred_region
        _
      $region20: #{conv2d_module_forward.1} parent=11 // pred_fallthru
        _
      // Predicated region
      $region21: #{conv2d_module_forward.1} parent=11 // pred_check
        %p212 = pneg %p102
      $region22: #{conv2d_module_forward.1} parent=11 // pred_check_branch
        %214 = sbr.rel (%p212) target = $region24
      $region23: #{conv2d_module_forward.1} parent=11 // pred_region
        _
      $region24: #{conv2d_module_forward.1} parent=11 // pred_fallthru
        _
      // Predicated region
      $region25: #{conv2d_module_forward.1} parent=11 // pred_check
        %p215 = pneg %p123
      $region26: #{conv2d_module_forward.1} parent=11 // pred_check_branch
        %217 = sbr.rel (%p215) target = $region28
      $region27: #{conv2d_module_forward.1} parent=11 // pred_region
        _
      $region28: #{conv2d_module_forward.1} parent=11 // pred_fallthru
        _
      // Predicated region
      $region29: #{conv2d_module_forward.1} parent=11 // pred_check
        %p218 = pneg %p144
      $region30: #{conv2d_module_forward.1} parent=11 // pred_check_branch
        %220 = sbr.rel (%p218) target = $region32
      $region31: #{conv2d_module_forward.1} parent=11 // pred_region
        _
      $region32: #{conv2d_module_forward.1} parent=11 // pred_fallthru
        _
      // Predicated region
      $region33: #{conv2d_module_forward.1} parent=11 // pred_check
        %p221 = pneg %p165
      $region34: #{conv2d_module_forward.1} parent=11 // pred_check_branch
        %223 = sbr.rel (%p221) target = $region36
      $region35: #{conv2d_module_forward.1} parent=11 // pred_region
        _
      $region36: #{conv2d_module_forward.1} parent=11 // pred_fallthru
        _
    $region12: #{conv2d_module_forward.1} parent=5 // pred_fallthru
      _
    %p224 = scmp.lt.s32.totalorder %s13, 2
    // Predicated region
    $region37: #{conv2d_module_forward.1} parent=5 // pred_check
      %p225 = pneg %p224
    $region38: #{conv2d_module_forward.1} parent=5 // pred_check_branch
      %227 = sbr.rel (%p225) target = $region40
    $region39: #{conv2d_module_forward.1} parent=5 // pred_region
      // Predicated region
      $region41: #{conv2d_module_forward.1} parent=39 // pred_check
        %p228 = pneg %p33
      $region42: #{conv2d_module_forward.1} parent=39 // pred_check_branch
        %230 = sbr.rel (%p228) target = $region44
      $region43: #{conv2d_module_forward.1} parent=39 // pred_region
        %p231 = scmp.lt.s32.totalorder %s13, 1
        %s232 = scalar_select %p231, %s13, 1
        %s233 = smul.addr %s232, 32
        %s234 = smul.addr %s233, 4
        %s235 = scalar_lea.vmem %s0, %s234
      $region44: #{conv2d_module_forward.1} parent=39 // pred_fallthru
        _
    $region40: #{conv2d_module_forward.1} parent=5 // pred_fallthru
      _
    %p236 = scmp.le.s32.totalorder 1, %s13
    %p237 = scmp.lt.s32.totalorder %s13, 3
    %p238 = pnand %p236, %p237
    %p239 = pneg %p238
    // Predicated region
    $region45: #{conv2d_module_forward.1} parent=5 // pred_check
      _
    $region46: #{conv2d_module_forward.1} parent=5 // pred_check_branch
      %241 = sbr.rel (%p238) target = $region48
    $region47: #{conv2d_module_forward.1} parent=5 // pred_region
      %s242 = ssub.s32 %s13, 1
      %p243 = scmp.lt.s32.totalorder %s18, 1
      %s244 = scalar_select %p243, %s18, 1
      %s245 = smul.addr %s244, 32
      %s246 = smul.addr %s245, 4
      %s247 = scalar_lea.vmem %s0, %s246
      %p248 = pneg %p39
      %p249 = pneg %p36
      %p250 = pneg %p60
      %p251 = pneg %p57
      %p252 = pneg %p81
      %p253 = pneg %p78
      %p254 = pneg %p102
      %p255 = pneg %p99
      %p256 = pneg %p123
      %p257 = pneg %p120
      %p258 = pneg %p144
      %p259 = pneg %p141
      %p260 = pneg %p165
      %p261 = pneg %p162
      %p262 = pneg %p191
      %p263 = pneg %p188
      %p264 = scmp.lt.s32.totalorder %s18, 1
      %s265 = scalar_select %p264, %s18, 1
      %s266 = smul.addr %s265, 28
      %s267 = smul.addr %s266, 8
      %s268 = scalar_lea.vmem %s7, %s267
      %p269 = scmp.lt.s32.totalorder %s18, 1
      %s270 = scalar_select %p269, %s18, 1
      %s271 = smul.addr %s270, 32
      %s272 = smul.addr %s271, 4
      %s273 = scalar_lea.vmem %s0, %s272
      %p274 = scmp.lt.s32.totalorder %s18, 1
      %s275 = scalar_select %p274, %s18, 1
      %s276 = smul.addr %s275, 28
      %s277 = smul.addr %s276, 8
      %s278 = scalar_lea.vmem %s7, %s277
      %v280 = vld [vmem:[%s273] sm:$0xf]
      %v281 = vld [vmem:[%s273 + $0x4] sm:$0xf]
      %v282 = vld [vmem:[%s273 + $0x8] sm:$0xf]
      %v283 = vld [vmem:[%s273 + $0xc] sm:$0xf]
      %v284 = vld [vmem:[%s273 + $0x10] sm:$0xf]
      %v285 = vld [vmem:[%s273 + $0x14] sm:$0xf]
      %v286 = vld [vmem:[%s273 + $0x18] sm:$0xf]
      %v287 = vld [vmem:[%s273 + $0x1c] sm:$0xf]
      %v288 = vld [vmem:[%s273 + $0x20] sm:$0xf]
      %v289 = vld [vmem:[%s273 + $0x24] sm:$0xf]
      %v290 = vld [vmem:[%s273 + $0x28] sm:$0xf]
      %v291 = vld [vmem:[%s273 + $0x2c] sm:$0xf]
      %v292 = vld [vmem:[%s273 + $0x30] sm:$0xf]
      %v293 = vld [vmem:[%s273 + $0x34] sm:$0xf]
      %v294 = vld [vmem:[%s273 + $0x38] sm:$0xf]
      %v295 = vld [vmem:[%s273 + $0x3c] sm:$0xf]
      %v296 = vld [vmem:[%s273 + $0x40] sm:$0xf]
      %v297 = vld [vmem:[%s273 + $0x44] sm:$0xf]
      %v298 = vld [vmem:[%s273 + $0x48] sm:$0xf]
      %v299 = vld [vmem:[%s273 + $0x4c] sm:$0xf]
      %v300 = vld [vmem:[%s273 + $0x50] sm:$0xf]
      %v301 = vld [vmem:[%s273 + $0x54] sm:$0xf]
      %v302 = vld [vmem:[%s273 + $0x58] sm:$0xf]
      %v303 = vld [vmem:[%s273 + $0x5c] sm:$0xf]
      %v304 = vld [vmem:[%s273 + $0x60] sm:$0xf]
      %v305 = vld [vmem:[%s273 + $0x64] sm:$0xf]
      %v306 = vld [vmem:[%s273 + $0x68] sm:$0xf]
      %v307 = vld [vmem:[%s273 + $0x6c] sm:$0xf]
      %v308 = vld [vmem:[%s1] sm:$0xf]
      %v309 = vld [vmem:[%s1 + $0x4] sm:$0xf]
      %v310 = vld [vmem:[%s1 + $0x8] sm:$0xf]
      %v311 = vld [vmem:[%s1 + $0xc] sm:$0xf]
      %v312 = vld [vmem:[%s1 + $0x10] sm:$0xf]
      %v313 = vld [vmem:[%s1 + $0x14] sm:$0xf]
      %v342 = vunpack.c.l.b16 %v280
      %v343 = vunpack.c.l.b16 %v281
      %v344 = vunpack.c.l.b16 %v282
      %v345 = vunpack.c.l.b16 %v283
      %v346 = vunpack.c.l.b16 %v284
      %v347 = vunpack.c.l.b16 %v285
      %v348 = vunpack.c.l.b16 %v286
      %v349 = vunpack.c.l.b16 %v287
      %v350 = vunpack.c.l.b16 %v288
      %v351 = vunpack.c.l.b16 %v289
      %v352 = vunpack.c.l.b16 %v290
      %v353 = vunpack.c.l.b16 %v291
      %v354 = vunpack.c.l.b16 %v292
      %v355 = vunpack.c.l.b16 %v293
      %v356 = vunpack.c.l.b16 %v294
      %v357 = vunpack.c.l.b16 %v295
      %v358 = vunpack.c.l.b16 %v296
      %v359 = vunpack.c.l.b16 %v297
      %v360 = vunpack.c.l.b16 %v298
      %v361 = vunpack.c.l.b16 %v299
      %v362 = vunpack.c.l.b16 %v300
      %v363 = vunpack.c.l.b16 %v301
      %v364 = vunpack.c.l.b16 %v302
      %v365 = vunpack.c.l.b16 %v303
      %v366 = vunpack.c.l.b16 %v304
      %v367 = vunpack.c.l.b16 %v305
      %v368 = vunpack.c.l.b16 %v306
      %v369 = vunpack.c.l.b16 %v307
      %v370 = vpack.c.b16 %v343, %v342
      %v371 = vpack.c.b16 %v345, %v344
      %v372 = vpack.c.b16 %v347, %v346
      %v373 = vpack.c.b16 %v349, %v348
      %v374 = vpack.c.b16 %v351, %v350
      %v375 = vpack.c.b16 %v353, %v352
      %v376 = vpack.c.b16 %v355, %v354
      %v377 = vpack.c.b16 %v357, %v356
      %v378 = vpack.c.b16 %v359, %v358
      %v379 = vpack.c.b16 %v361, %v360
      %v380 = vpack.c.b16 %v363, %v362
      %v381 = vpack.c.b16 %v365, %v364
      %v382 = vpack.c.b16 %v367, %v366
      %v383 = vpack.c.b16 %v369, %v368
      %v390 = vunpack.c.l.b16 %v308
      %v391 = vunpack.c.l.b16 %v309
      %v392 = vunpack.c.l.b16 %v310
      %v393 = vunpack.c.l.b16 %v311
      %v394 = vunpack.c.l.b16 %v312
      %v395 = vunpack.c.l.b16 %v313
      %v396 = vpack.c.b16 %v391, %v390
      %v397 = vpack.c.b16 %v393, %v392
      %v398 = vpack.c.b16 %v395, %v394
      %vm402 = vcmask 392192
      %v404 = vsel %vm402, %v370, 0
      %v407 = vsel %vm402, %v371, 0
      %v410 = vsel %vm402, %v372, 0
      %v413 = vsel %vm402, %v373, 0
      %v416 = vsel %vm402, %v374, 0
      %v419 = vsel %vm402, %v375, 0
      %v422 = vsel %vm402, %v376, 0
      %v425 = vsel %vm402, %v377, 0
      %v428 = vsel %vm402, %v378, 0
      %v431 = vsel %vm402, %v379, 0
      %v434 = vsel %vm402, %v380, 0
      %v437 = vsel %vm402, %v381, 0
      %v440 = vsel %vm402, %v382, 0
      %v443 = vsel %vm402, %v383, 0
      %445 = vmatpush.bf16.msra.mxu0 0
      %446 = vmatpush.bf16.msra.mxu0 0
      %447 = vmatpush.bf16.msra.mxu0 0
      %448 = vmatpush.bf16.msra.mxu0 0
      %449 = vmatpush.bf16.msra.mxu0 0
      %450 = vmatpush.bf16.msra.mxu0 %v398
      %451 = vmatpush.bf16.msra.mxu0 %v397
      %452 = vmatpush.bf16.msra.mxu0 %v396
      %453 = vmatmul.bf16.gmra.mxu0 %v404
      %v454 = vpop.f32.mrf.mxu0
      %v455 = vadd.f32 0.0, %v454
      %v456 = vpop.f32.mrf.mxu0
      %v457 = vadd.f32 0.0, %v456
      %458 = vmatmul.bf16.gmra.mxu0 %v407
      %v459 = vpop.f32.mrf.mxu0
      %v460 = vadd.f32 0.0, %v459
      %v461 = vpop.f32.mrf.mxu0
      %v462 = vadd.f32 0.0, %v461
      %463 = vmatmul.bf16.gmra.mxu0 %v410
      %v464 = vpop.f32.mrf.mxu0
      %v465 = vadd.f32 0.0, %v464
      %v466 = vpop.f32.mrf.mxu0
      %v467 = vadd.f32 0.0, %v466
      %468 = vmatmul.bf16.gmra.mxu0 %v413
      %v469 = vpop.f32.mrf.mxu0
      %v470 = vadd.f32 0.0, %v469
      %v471 = vpop.f32.mrf.mxu0
      %v472 = vadd.f32 0.0, %v471
      %473 = vmatmul.bf16.gmra.mxu0 %v416
      %v474 = vpop.f32.mrf.mxu0
      %v475 = vadd.f32 0.0, %v474
      %v476 = vpop.f32.mrf.mxu0
      %v477 = vadd.f32 0.0, %v476
      %478 = vmatmul.bf16.gmra.mxu0 %v419
      %v479 = vpop.f32.mrf.mxu0
      %v480 = vadd.f32 0.0, %v479
      %v481 = vpop.f32.mrf.mxu0
      %v482 = vadd.f32 0.0, %v481
      %483 = vmatmul.bf16.gmra.mxu0 %v422
      %v484 = vpop.f32.mrf.mxu0
      %v485 = vadd.f32 0.0, %v484
      %v486 = vpop.f32.mrf.mxu0
      %v487 = vadd.f32 0.0, %v486
      %488 = vmatmul.bf16.gmra.mxu0 %v425
      %v489 = vpop.f32.mrf.mxu0
      %v490 = vadd.f32 0.0, %v489
      %v491 = vpop.f32.mrf.mxu0
      %v492 = vadd.f32 0.0, %v491
      %493 = vmatmul.bf16.gmra.mxu0 %v428
      %v494 = vpop.f32.mrf.mxu0
      %v495 = vadd.f32 0.0, %v494
      %v496 = vpop.f32.mrf.mxu0
      %v497 = vadd.f32 0.0, %v496
      %498 = vmatmul.bf16.gmra.mxu0 %v431
      %v499 = vpop.f32.mrf.mxu0
      %v500 = vadd.f32 0.0, %v499
      %v501 = vpop.f32.mrf.mxu0
      %v502 = vadd.f32 0.0, %v501
      %503 = vmatmul.bf16.gmra.mxu0 %v434
      %v504 = vpop.f32.mrf.mxu0
      %v505 = vadd.f32 0.0, %v504
      %v506 = vpop.f32.mrf.mxu0
      %v507 = vadd.f32 0.0, %v506
      %508 = vmatmul.bf16.gmra.mxu0 %v437
      %v509 = vpop.f32.mrf.mxu0
      %v510 = vadd.f32 0.0, %v509
      %v511 = vpop.f32.mrf.mxu0
      %v512 = vadd.f32 0.0, %v511
      %513 = vmatmul.bf16.gmra.mxu0 %v440
      %v514 = vpop.f32.mrf.mxu0
      %v515 = vadd.f32 0.0, %v514
      %v516 = vpop.f32.mrf.mxu0
      %v517 = vadd.f32 0.0, %v516
      %518 = vmatmul.bf16.gmra.mxu0 %v443
      %v519 = vpop.f32.mrf.mxu0
      %v520 = vadd.f32 0.0, %v519
      %v521 = vpop.f32.mrf.mxu0
      %v522 = vadd.f32 0.0, %v521
      %523 = vdwg.mxu0
      %524 = vst [vmem:[#allocation2] sm:$0xff] %v455
      %525 = vst [vmem:[#allocation2 + $0x8] sm:$0xff] %v457
      %526 = vst [vmem:[#allocation2 + $0x10] sm:$0xff] %v460
      %527 = vst [vmem:[#allocation2 + $0x18] sm:$0xff] %v462
      %528 = vst [vmem:[#allocation2 + $0x20] sm:$0xff] %v465
      %529 = vst [vmem:[#allocation2 + $0x28] sm:$0xff] %v467
      %530 = vst [vmem:[#allocation2 + $0x30] sm:$0xff] %v470
      %531 = vst [vmem:[#allocation2 + $0x38] sm:$0xff] %v472
      %532 = vst [vmem:[#allocation2 + $0x40] sm:$0xff] %v475
      %533 = vst [vmem:[#allocation2 + $0x48] sm:$0xff] %v477
      %534 = vst [vmem:[#allocation2 + $0x50] sm:$0xff] %v480
      %535 = vst [vmem:[#allocation2 + $0x58] sm:$0xff] %v482
      %536 = vst [vmem:[#allocation2 + $0x60] sm:$0xff] %v485
      %537 = vst [vmem:[#allocation2 + $0x68] sm:$0xff] %v487
      %538 = vst [vmem:[#allocation2 + $0x70] sm:$0xff] %v490
      %539 = vst [vmem:[#allocation2 + $0x78] sm:$0xff] %v492
      %540 = vst [vmem:[#allocation2 + $0x80] sm:$0xff] %v495
      %541 = vst [vmem:[#allocation2 + $0x88] sm:$0xff] %v497
      %542 = vst [vmem:[#allocation2 + $0x90] sm:$0xff] %v500
      %543 = vst [vmem:[#allocation2 + $0x98] sm:$0xff] %v502
      %544 = vst [vmem:[#allocation2 + $0xa0] sm:$0xff] %v505
      %545 = vst [vmem:[#allocation2 + $0xa8] sm:$0xff] %v507
      %546 = vst [vmem:[#allocation2 + $0xb0] sm:$0xff] %v510
      %547 = vst [vmem:[#allocation2 + $0xb8] sm:$0xff] %v512
      %548 = vst [vmem:[#allocation2 + $0xc0] sm:$0xff] %v515
      %549 = vst [vmem:[#allocation2 + $0xc8] sm:$0xff] %v517
      %550 = vst [vmem:[#allocation2 + $0xd0] sm:$0xff] %v520
      %551 = vst [vmem:[#allocation2 + $0xd8] sm:$0xff] %v522
      %v552 = vld [vmem:[%s273 + $0x8] sm:$0xf]
      %v553 = vld [vmem:[%s273 + $0xc] sm:$0xf]
      %v554 = vld [vmem:[%s273 + $0x10] sm:$0xf]
      %v555 = vld [vmem:[%s273 + $0x14] sm:$0xf]
      %v556 = vld [vmem:[%s273 + $0x18] sm:$0xf]
      %v557 = vld [vmem:[%s273 + $0x1c] sm:$0xf]
      %v558 = vld [vmem:[%s273 + $0x20] sm:$0xf]
      %v559 = vld [vmem:[%s273 + $0x24] sm:$0xf]
      %v560 = vld [vmem:[%s273 + $0x28] sm:$0xf]
      %v561 = vld [vmem:[%s273 + $0x2c] sm:$0xf]
      %v562 = vld [vmem:[%s273 + $0x30] sm:$0xf]
      %v563 = vld [vmem:[%s273 + $0x34] sm:$0xf]
      %v564 = vld [vmem:[%s273 + $0x38] sm:$0xf]
      %v565 = vld [vmem:[%s273 + $0x3c] sm:$0xf]
      %v566 = vld [vmem:[%s273 + $0x40] sm:$0xf]
      %v567 = vld [vmem:[%s273 + $0x44] sm:$0xf]
      %v568 = vld [vmem:[%s273 + $0x48] sm:$0xf]
      %v569 = vld [vmem:[%s273 + $0x4c] sm:$0xf]
      %v570 = vld [vmem:[%s273 + $0x50] sm:$0xf]
      %v571 = vld [vmem:[%s273 + $0x54] sm:$0xf]
      %v572 = vld [vmem:[%s273 + $0x58] sm:$0xf]
      %v573 = vld [vmem:[%s273 + $0x5c] sm:$0xf]
      %v574 = vld [vmem:[%s273 + $0x60] sm:$0xf]
      %v575 = vld [vmem:[%s273 + $0x64] sm:$0xf]
      %v576 = vld [vmem:[%s273 + $0x68] sm:$0xf]
      %v577 = vld [vmem:[%s273 + $0x6c] sm:$0xf]
      %v578 = vld [vmem:[%s273 + $0x70] sm:$0xf]
      %v579 = vld [vmem:[%s273 + $0x74] sm:$0xf]
      %s580 = scalar_lea.vmem %s1, 24
      %v581 = vld [vmem:[%s580] sm:$0xf]
      %v582 = vld [vmem:[%s580 + $0x4] sm:$0xf]
      %v583 = vld [vmem:[%s580 + $0x8] sm:$0xf]
      %v584 = vld [vmem:[%s580 + $0xc] sm:$0xf]
      %v585 = vld [vmem:[%s580 + $0x10] sm:$0xf]
      %v586 = vld [vmem:[%s580 + $0x14] sm:$0xf]
      %v615 = vunpack.c.l.b16 %v552
      %v616 = vunpack.c.l.b16 %v553
      %v617 = vunpack.c.l.b16 %v554
      %v618 = vunpack.c.l.b16 %v555
      %v619 = vunpack.c.l.b16 %v556
      %v620 = vunpack.c.l.b16 %v557
      %v621 = vunpack.c.l.b16 %v558
      %v622 = vunpack.c.l.b16 %v559
      %v623 = vunpack.c.l.b16 %v560
      %v624 = vunpack.c.l.b16 %v561
      %v625 = vunpack.c.l.b16 %v562
      %v626 = vunpack.c.l.b16 %v563
      %v627 = vunpack.c.l.b16 %v564
      %v628 = vunpack.c.l.b16 %v565
      %v629 = vunpack.c.l.b16 %v566
      %v630 = vunpack.c.l.b16 %v567
      %v631 = vunpack.c.l.b16 %v568
      %v632 = vunpack.c.l.b16 %v569
      %v633 = vunpack.c.l.b16 %v570
      %v634 = vunpack.c.l.b16 %v571
      %v635 = vunpack.c.l.b16 %v572
      %v636 = vunpack.c.l.b16 %v573
      %v637 = vunpack.c.l.b16 %v574
      %v638 = vunpack.c.l.b16 %v575
      %v639 = vunpack.c.l.b16 %v576
      %v640 = vunpack.c.l.b16 %v577
      %v641 = vunpack.c.l.b16 %v578
      %v642 = vunpack.c.l.b16 %v579
      %v643 = vpack.c.b16 %v616, %v615
      %v644 = vpack.c.b16 %v618, %v617
      %v645 = vpack.c.b16 %v620, %v619
      %v646 = vpack.c.b16 %v622, %v621
      %v647 = vpack.c.b16 %v624, %v623
      %v648 = vpack.c.b16 %v626, %v625
      %v649 = vpack.c.b16 %v628, %v627
      %v650 = vpack.c.b16 %v630, %v629
      %v651 = vpack.c.b16 %v632, %v631
      %v652 = vpack.c.b16 %v634, %v633
      %v653 = vpack.c.b16 %v636, %v635
      %v654 = vpack.c.b16 %v638, %v637
      %v655 = vpack.c.b16 %v640, %v639
      %v656 = vpack.c.b16 %v642, %v641
      %v663 = vunpack.c.l.b16 %v581
      %v664 = vunpack.c.l.b16 %v582
      %v665 = vunpack.c.l.b16 %v583
      %v666 = vunpack.c.l.b16 %v584
      %v667 = vunpack.c.l.b16 %v585
      %v668 = vunpack.c.l.b16 %v586
      %v669 = vpack.c.b16 %v664, %v663
      %v670 = vpack.c.b16 %v666, %v665
      %v671 = vpack.c.b16 %v668, %v667
      %v676 = vsel %vm402, %v643, 0
      %v679 = vsel %vm402, %v644, 0
      %v682 = vsel %vm402, %v645, 0
      %v685 = vsel %vm402, %v646, 0
      %v688 = vsel %vm402, %v647, 0
      %v691 = vsel %vm402, %v648, 0
      %v694 = vsel %vm402, %v649, 0
      %v697 = vsel %vm402, %v650, 0
      %v700 = vsel %vm402, %v651, 0
      %v703 = vsel %vm402, %v652, 0
      %v706 = vsel %vm402, %v653, 0
      %v709 = vsel %vm402, %v654, 0
      %v712 = vsel %vm402, %v655, 0
      %v715 = vsel %vm402, %v656, 0
      %717 = vmatpush.bf16.msra.mxu0 0
      %718 = vmatpush.bf16.msra.mxu0 0
      %719 = vmatpush.bf16.msra.mxu0 0
      %720 = vmatpush.bf16.msra.mxu0 0
      %721 = vmatpush.bf16.msra.mxu0 0
      %722 = vmatpush.bf16.msra.mxu0 %v671
      %723 = vmatpush.bf16.msra.mxu0 %v670
      %724 = vmatpush.bf16.msra.mxu0 %v669
      %725 = vmatmul.bf16.gmra.mxu0 %v676
      %v726 = vpop.f32.mrf.mxu0
      %v727 = vadd.f32 0.0, %v726
      %v728 = vpop.f32.mrf.mxu0
      %v729 = vadd.f32 0.0, %v728
      %730 = vmatmul.bf16.gmra.mxu0 %v679
      %v731 = vpop.f32.mrf.mxu0
      %v732 = vadd.f32 0.0, %v731
      %v733 = vpop.f32.mrf.mxu0
      %v734 = vadd.f32 0.0, %v733
      %735 = vmatmul.bf16.gmra.mxu0 %v682
      %v736 = vpop.f32.mrf.mxu0
      %v737 = vadd.f32 0.0, %v736
      %v738 = vpop.f32.mrf.mxu0
      %v739 = vadd.f32 0.0, %v738
      %740 = vmatmul.bf16.gmra.mxu0 %v685
      %v741 = vpop.f32.mrf.mxu0
      %v742 = vadd.f32 0.0, %v741
      %v743 = vpop.f32.mrf.mxu0
      %v744 = vadd.f32 0.0, %v743
      %745 = vmatmul.bf16.gmra.mxu0 %v688
      %v746 = vpop.f32.mrf.mxu0
      %v747 = vadd.f32 0.0, %v746
      %v748 = vpop.f32.mrf.mxu0
      %v749 = vadd.f32 0.0, %v748
      %750 = vmatmul.bf16.gmra.mxu0 %v691
      %v751 = vpop.f32.mrf.mxu0
      %v752 = vadd.f32 0.0, %v751
      %v753 = vpop.f32.mrf.mxu0
      %v754 = vadd.f32 0.0, %v753
      %755 = vmatmul.bf16.gmra.mxu0 %v694
      %v756 = vpop.f32.mrf.mxu0
      %v757 = vadd.f32 0.0, %v756
      %v758 = vpop.f32.mrf.mxu0
      %v759 = vadd.f32 0.0, %v758
      %760 = vmatmul.bf16.gmra.mxu0 %v697
      %v761 = vpop.f32.mrf.mxu0
      %v762 = vadd.f32 0.0, %v761
      %v763 = vpop.f32.mrf.mxu0
      %v764 = vadd.f32 0.0, %v763
      %765 = vmatmul.bf16.gmra.mxu0 %v700
      %v766 = vpop.f32.mrf.mxu0
      %v767 = vadd.f32 0.0, %v766
      %v768 = vpop.f32.mrf.mxu0
      %v769 = vadd.f32 0.0, %v768
      %770 = vmatmul.bf16.gmra.mxu0 %v703
      %v771 = vpop.f32.mrf.mxu0
      %v772 = vadd.f32 0.0, %v771
      %v773 = vpop.f32.mrf.mxu0
      %v774 = vadd.f32 0.0, %v773
      %775 = vmatmul.bf16.gmra.mxu0 %v706
      %v776 = vpop.f32.mrf.mxu0
      %v777 = vadd.f32 0.0, %v776
      %v778 = vpop.f32.mrf.mxu0
      %v779 = vadd.f32 0.0, %v778
      %780 = vmatmul.bf16.gmra.mxu0 %v709
      %v781 = vpop.f32.mrf.mxu0
      %v782 = vadd.f32 0.0, %v781
      %v783 = vpop.f32.mrf.mxu0
      %v784 = vadd.f32 0.0, %v783
      %785 = vmatmul.bf16.gmra.mxu0 %v712
      %v786 = vpop.f32.mrf.mxu0
      %v787 = vadd.f32 0.0, %v786
      %v788 = vpop.f32.mrf.mxu0
      %v789 = vadd.f32 0.0, %v788
      %790 = vmatmul.bf16.gmra.mxu0 %v715
      %v791 = vpop.f32.mrf.mxu0
      %v792 = vadd.f32 0.0, %v791
      %v793 = vpop.f32.mrf.mxu0
      %v794 = vadd.f32 0.0, %v793
      %795 = vdwg.mxu0
      %v796 = vld [vmem:[#allocation2] sm:$0xff]
      %v797 = vld [vmem:[#allocation2 + $0x8] sm:$0xff]
      %v798 = vld [vmem:[#allocation2 + $0x10] sm:$0xff]
      %v799 = vld [vmem:[#allocation2 + $0x18] sm:$0xff]
      %v800 = vld [vmem:[#allocation2 + $0x20] sm:$0xff]
      %v801 = vld [vmem:[#allocation2 + $0x28] sm:$0xff]
      %v802 = vld [vmem:[#allocation2 + $0x30] sm:$0xff]
      %v803 = vld [vmem:[#allocation2 + $0x38] sm:$0xff]
      %v804 = vld [vmem:[#allocation2 + $0x40] sm:$0xff]
      %v805 = vld [vmem:[#allocation2 + $0x48] sm:$0xff]
      %v806 = vld [vmem:[#allocation2 + $0x50] sm:$0xff]
      %v807 = vld [vmem:[#allocation2 + $0x58] sm:$0xff]
      %v808 = vld [vmem:[#allocation2 + $0x60] sm:$0xff]
      %v809 = vld [vmem:[#allocation2 + $0x68] sm:$0xff]
      %v810 = vld [vmem:[#allocation2 + $0x70] sm:$0xff]
      %v811 = vld [vmem:[#allocation2 + $0x78] sm:$0xff]
      %v812 = vld [vmem:[#allocation2 + $0x80] sm:$0xff]
      %v813 = vld [vmem:[#allocation2 + $0x88] sm:$0xff]
      %v814 = vld [vmem:[#allocation2 + $0x90] sm:$0xff]
      %v815 = vld [vmem:[#allocation2 + $0x98] sm:$0xff]
      %v816 = vld [vmem:[#allocation2 + $0xa0] sm:$0xff]
      %v817 = vld [vmem:[#allocation2 + $0xa8] sm:$0xff]
      %v818 = vld [vmem:[#allocation2 + $0xb0] sm:$0xff]
      %v819 = vld [vmem:[#allocation2 + $0xb8] sm:$0xff]
      %v820 = vld [vmem:[#allocation2 + $0xc0] sm:$0xff]
      %v821 = vld [vmem:[#allocation2 + $0xc8] sm:$0xff]
      %v822 = vld [vmem:[#allocation2 + $0xd0] sm:$0xff]
      %v823 = vld [vmem:[#allocation2 + $0xd8] sm:$0xff]
      %v824 = vadd.f32 %v796, %v727
      %v825 = vadd.f32 %v797, %v729
      %v826 = vadd.f32 %v798, %v732
      %v827 = vadd.f32 %v799, %v734
      %v828 = vadd.f32 %v800, %v737
      %v829 = vadd.f32 %v801, %v739
      %v830 = vadd.f32 %v802, %v742
      %v831 = vadd.f32 %v803, %v744
      %v832 = vadd.f32 %v804, %v747
      %v833 = vadd.f32 %v805, %v749
      %v834 = vadd.f32 %v806, %v752
      %v835 = vadd.f32 %v807, %v754
      %v836 = vadd.f32 %v808, %v757
      %v837 = vadd.f32 %v809, %v759
      %v838 = vadd.f32 %v810, %v762
      %v839 = vadd.f32 %v811, %v764
      %v840 = vadd.f32 %v812, %v767
      %v841 = vadd.f32 %v813, %v769
      %v842 = vadd.f32 %v814, %v772
      %v843 = vadd.f32 %v815, %v774
      %v844 = vadd.f32 %v816, %v777
      %v845 = vadd.f32 %v817, %v779
      %v846 = vadd.f32 %v818, %v782
      %v847 = vadd.f32 %v819, %v784
      %v848 = vadd.f32 %v820, %v787
      %v849 = vadd.f32 %v821, %v789
      %v850 = vadd.f32 %v822, %v792
      %v851 = vadd.f32 %v823, %v794
      %852 = vst [vmem:[#allocation2] sm:$0xff] %v824
      %853 = vst [vmem:[#allocation2 + $0x8] sm:$0xff] %v825
      %854 = vst [vmem:[#allocation2 + $0x10] sm:$0xff] %v826
      %855 = vst [vmem:[#allocation2 + $0x18] sm:$0xff] %v827
      %856 = vst [vmem:[#allocation2 + $0x20] sm:$0xff] %v828
      %857 = vst [vmem:[#allocation2 + $0x28] sm:$0xff] %v829
      %858 = vst [vmem:[#allocation2 + $0x30] sm:$0xff] %v830
      %859 = vst [vmem:[#allocation2 + $0x38] sm:$0xff] %v831
      %860 = vst [vmem:[#allocation2 + $0x40] sm:$0xff] %v832
      %861 = vst [vmem:[#allocation2 + $0x48] sm:$0xff] %v833
      %862 = vst [vmem:[#allocation2 + $0x50] sm:$0xff] %v834
      %863 = vst [vmem:[#allocation2 + $0x58] sm:$0xff] %v835
      %864 = vst [vmem:[#allocation2 + $0x60] sm:$0xff] %v836
      %865 = vst [vmem:[#allocation2 + $0x68] sm:$0xff] %v837
      %866 = vst [vmem:[#allocation2 + $0x70] sm:$0xff] %v838
      %867 = vst [vmem:[#allocation2 + $0x78] sm:$0xff] %v839
      %868 = vst [vmem:[#allocation2 + $0x80] sm:$0xff] %v840
      %869 = vst [vmem:[#allocation2 + $0x88] sm:$0xff] %v841
      %870 = vst [vmem:[#allocation2 + $0x90] sm:$0xff] %v842
      %871 = vst [vmem:[#allocation2 + $0x98] sm:$0xff] %v843
      %872 = vst [vmem:[#allocation2 + $0xa0] sm:$0xff] %v844
      %873 = vst [vmem:[#allocation2 + $0xa8] sm:$0xff] %v845
      %874 = vst [vmem:[#allocation2 + $0xb0] sm:$0xff] %v846
      %875 = vst [vmem:[#allocation2 + $0xb8] sm:$0xff] %v847
      %876 = vst [vmem:[#allocation2 + $0xc0] sm:$0xff] %v848
      %877 = vst [vmem:[#allocation2 + $0xc8] sm:$0xff] %v849
      %878 = vst [vmem:[#allocation2 + $0xd0] sm:$0xff] %v850
      %879 = vst [vmem:[#allocation2 + $0xd8] sm:$0xff] %v851
      %v880 = vld [vmem:[%s273 + $0x10] sm:$0xf]
      %v881 = vld [vmem:[%s273 + $0x14] sm:$0xf]
      %v882 = vld [vmem:[%s273 + $0x18] sm:$0xf]
      %v883 = vld [vmem:[%s273 + $0x1c] sm:$0xf]
      %v884 = vld [vmem:[%s273 + $0x20] sm:$0xf]
      %v885 = vld [vmem:[%s273 + $0x24] sm:$0xf]
      %v886 = vld [vmem:[%s273 + $0x28] sm:$0xf]
      %v887 = vld [vmem:[%s273 + $0x2c] sm:$0xf]
      %v888 = vld [vmem:[%s273 + $0x30] sm:$0xf]
      %v889 = vld [vmem:[%s273 + $0x34] sm:$0xf]
      %v890 = vld [vmem:[%s273 + $0x38] sm:$0xf]
      %v891 = vld [vmem:[%s273 + $0x3c] sm:$0xf]
      %v892 = vld [vmem:[%s273 + $0x40] sm:$0xf]
      %v893 = vld [vmem:[%s273 + $0x44] sm:$0xf]
      %v894 = vld [vmem:[%s273 + $0x48] sm:$0xf]
      %v895 = vld [vmem:[%s273 + $0x4c] sm:$0xf]
      %v896 = vld [vmem:[%s273 + $0x50] sm:$0xf]
      %v897 = vld [vmem:[%s273 + $0x54] sm:$0xf]
      %v898 = vld [vmem:[%s273 + $0x58] sm:$0xf]
      %v899 = vld [vmem:[%s273 + $0x5c] sm:$0xf]
      %v900 = vld [vmem:[%s273 + $0x60] sm:$0xf]
      %v901 = vld [vmem:[%s273 + $0x64] sm:$0xf]
      %v902 = vld [vmem:[%s273 + $0x68] sm:$0xf]
      %v903 = vld [vmem:[%s273 + $0x6c] sm:$0xf]
      %v904 = vld [vmem:[%s273 + $0x70] sm:$0xf]
      %v905 = vld [vmem:[%s273 + $0x74] sm:$0xf]
      %v906 = vld [vmem:[%s273 + $0x78] sm:$0xf]
      %v907 = vld [vmem:[%s273 + $0x7c] sm:$0xf]
      %s908 = scalar_lea.vmem %s1, 48
      %v909 = vld [vmem:[%s908] sm:$0xf]
      %v910 = vld [vmem:[%s908 + $0x4] sm:$0xf]
      %v911 = vld [vmem:[%s908 + $0x8] sm:$0xf]
      %v912 = vld [vmem:[%s908 + $0xc] sm:$0xf]
      %v913 = vld [vmem:[%s908 + $0x10] sm:$0xf]
      %v914 = vld [vmem:[%s908 + $0x14] sm:$0xf]
      %v943 = vunpack.c.l.b16 %v880
      %v944 = vunpack.c.l.b16 %v881
      %v945 = vunpack.c.l.b16 %v882
      %v946 = vunpack.c.l.b16 %v883
      %v947 = vunpack.c.l.b16 %v884
      %v948 = vunpack.c.l.b16 %v885
      %v949 = vunpack.c.l.b16 %v886
      %v950 = vunpack.c.l.b16 %v887
      %v951 = vunpack.c.l.b16 %v888
      %v952 = vunpack.c.l.b16 %v889
      %v953 = vunpack.c.l.b16 %v890
      %v954 = vunpack.c.l.b16 %v891
      %v955 = vunpack.c.l.b16 %v892
      %v956 = vunpack.c.l.b16 %v893
      %v957 = vunpack.c.l.b16 %v894
      %v958 = vunpack.c.l.b16 %v895
      %v959 = vunpack.c.l.b16 %v896
      %v960 = vunpack.c.l.b16 %v897
      %v961 = vunpack.c.l.b16 %v898
      %v962 = vunpack.c.l.b16 %v899
      %v963 = vunpack.c.l.b16 %v900
      %v964 = vunpack.c.l.b16 %v901
      %v965 = vunpack.c.l.b16 %v902
      %v966 = vunpack.c.l.b16 %v903
      %v967 = vunpack.c.l.b16 %v904
      %v968 = vunpack.c.l.b16 %v905
      %v969 = vunpack.c.l.b16 %v906
      %v970 = vunpack.c.l.b16 %v907
      %v971 = vpack.c.b16 %v944, %v943
      %v972 = vpack.c.b16 %v946, %v945
      %v973 = vpack.c.b16 %v948, %v947
      %v974 = vpack.c.b16 %v950, %v949
      %v975 = vpack.c.b16 %v952, %v951
      %v976 = vpack.c.b16 %v954, %v953
      %v977 = vpack.c.b16 %v956, %v955
      %v978 = vpack.c.b16 %v958, %v957
      %v979 = vpack.c.b16 %v960, %v959
      %v980 = vpack.c.b16 %v962, %v961
      %v981 = vpack.c.b16 %v964, %v963
      %v982 = vpack.c.b16 %v966, %v965
      %v983 = vpack.c.b16 %v968, %v967
      %v984 = vpack.c.b16 %v970, %v969
      %v991 = vunpack.c.l.b16 %v909
      %v992 = vunpack.c.l.b16 %v910
      %v993 = vunpack.c.l.b16 %v911
      %v994 = vunpack.c.l.b16 %v912
      %v995 = vunpack.c.l.b16 %v913
      %v996 = vunpack.c.l.b16 %v914
      %v997 = vpack.c.b16 %v992, %v991
      %v998 = vpack.c.b16 %v994, %v993
      %v999 = vpack.c.b16 %v996, %v995
      %v1004 = vsel %vm402, %v971, 0
      %v1007 = vsel %vm402, %v972, 0
      %v1010 = vsel %vm402, %v973, 0
      %v1013 = vsel %vm402, %v974, 0
      %v1016 = vsel %vm402, %v975, 0
      %v1019 = vsel %vm402, %v976, 0
      %v1022 = vsel %vm402, %v977, 0
      %v1025 = vsel %vm402, %v978, 0
      %v1028 = vsel %vm402, %v979, 0
      %v1031 = vsel %vm402, %v980, 0
      %v1034 = vsel %vm402, %v981, 0
      %v1037 = vsel %vm402, %v982, 0
      %v1040 = vsel %vm402, %v983, 0
      %v1043 = vsel %vm402, %v984, 0
      %1045 = vmatpush.bf16.msra.mxu0 0
      %1046 = vmatpush.bf16.msra.mxu0 0
      %1047 = vmatpush.bf16.msra.mxu0 0
      %1048 = vmatpush.bf16.msra.mxu0 0
      %1049 = vmatpush.bf16.msra.mxu0 0
      %1050 = vmatpush.bf16.msra.mxu0 %v999
      %1051 = vmatpush.bf16.msra.mxu0 %v998
      %1052 = vmatpush.bf16.msra.mxu0 %v997
      %1053 = vmatmul.bf16.gmra.mxu0 %v1004
      %v1054 = vpop.f32.mrf.mxu0
      %v1055 = vadd.f32 0.0, %v1054
      %v1056 = vpop.f32.mrf.mxu0
      %v1057 = vadd.f32 0.0, %v1056
      %1058 = vmatmul.bf16.gmra.mxu0 %v1007
      %v1059 = vpop.f32.mrf.mxu0
      %v1060 = vadd.f32 0.0, %v1059
      %v1061 = vpop.f32.mrf.mxu0
      %v1062 = vadd.f32 0.0, %v1061
      %1063 = vmatmul.bf16.gmra.mxu0 %v1010
      %v1064 = vpop.f32.mrf.mxu0
      %v1065 = vadd.f32 0.0, %v1064
      %v1066 = vpop.f32.mrf.mxu0
      %v1067 = vadd.f32 0.0, %v1066
      %1068 = vmatmul.bf16.gmra.mxu0 %v1013
      %v1069 = vpop.f32.mrf.mxu0
      %v1070 = vadd.f32 0.0, %v1069
      %v1071 = vpop.f32.mrf.mxu0
      %v1072 = vadd.f32 0.0, %v1071
      %1073 = vmatmul.bf16.gmra.mxu0 %v1016
      %v1074 = vpop.f32.mrf.mxu0
      %v1075 = vadd.f32 0.0, %v1074
      %v1076 = vpop.f32.mrf.mxu0
      %v1077 = vadd.f32 0.0, %v1076
      %1078 = vmatmul.bf16.gmra.mxu0 %v1019
      %v1079 = vpop.f32.mrf.mxu0
      %v1080 = vadd.f32 0.0, %v1079
      %v1081 = vpop.f32.mrf.mxu0
      %v1082 = vadd.f32 0.0, %v1081
      %1083 = vmatmul.bf16.gmra.mxu0 %v1022
      %v1084 = vpop.f32.mrf.mxu0
      %v1085 = vadd.f32 0.0, %v1084
      %v1086 = vpop.f32.mrf.mxu0
      %v1087 = vadd.f32 0.0, %v1086
      %1088 = vmatmul.bf16.gmra.mxu0 %v1025
      %v1089 = vpop.f32.mrf.mxu0
      %v1090 = vadd.f32 0.0, %v1089
      %v1091 = vpop.f32.mrf.mxu0
      %v1092 = vadd.f32 0.0, %v1091
      %1093 = vmatmul.bf16.gmra.mxu0 %v1028
      %v1094 = vpop.f32.mrf.mxu0
      %v1095 = vadd.f32 0.0, %v1094
      %v1096 = vpop.f32.mrf.mxu0
      %v1097 = vadd.f32 0.0, %v1096
      %1098 = vmatmul.bf16.gmra.mxu0 %v1031
      %v1099 = vpop.f32.mrf.mxu0
      %v1100 = vadd.f32 0.0, %v1099
      %v1101 = vpop.f32.mrf.mxu0
      %v1102 = vadd.f32 0.0, %v1101
      %1103 = vmatmul.bf16.gmra.mxu0 %v1034
      %v1104 = vpop.f32.mrf.mxu0
      %v1105 = vadd.f32 0.0, %v1104
      %v1106 = vpop.f32.mrf.mxu0
      %v1107 = vadd.f32 0.0, %v1106
      %1108 = vmatmul.bf16.gmra.mxu0 %v1037
      %v1109 = vpop.f32.mrf.mxu0
      %v1110 = vadd.f32 0.0, %v1109
      %v1111 = vpop.f32.mrf.mxu0
      %v1112 = vadd.f32 0.0, %v1111
      %1113 = vmatmul.bf16.gmra.mxu0 %v1040
      %v1114 = vpop.f32.mrf.mxu0
      %v1115 = vadd.f32 0.0, %v1114
      %v1116 = vpop.f32.mrf.mxu0
      %v1117 = vadd.f32 0.0, %v1116
      %1118 = vmatmul.bf16.gmra.mxu0 %v1043
      %v1119 = vpop.f32.mrf.mxu0
      %v1120 = vadd.f32 0.0, %v1119
      %v1121 = vpop.f32.mrf.mxu0
      %v1122 = vadd.f32 0.0, %v1121
      %1123 = vdwg.mxu0
      %v1124 = vld [vmem:[#allocation2] sm:$0xff]
      %v1125 = vld [vmem:[#allocation2 + $0x8] sm:$0xff]
      %v1126 = vld [vmem:[#allocation2 + $0x10] sm:$0xff]
      %v1127 = vld [vmem:[#allocation2 + $0x18] sm:$0xff]
      %v1128 = vld [vmem:[#allocation2 + $0x20] sm:$0xff]
      %v1129 = vld [vmem:[#allocation2 + $0x28] sm:$0xff]
      %v1130 = vld [vmem:[#allocation2 + $0x30] sm:$0xff]
      %v1131 = vld [vmem:[#allocation2 + $0x38] sm:$0xff]
      %v1132 = vld [vmem:[#allocation2 + $0x40] sm:$0xff]
      %v1133 = vld [vmem:[#allocation2 + $0x48] sm:$0xff]
      %v1134 = vld [vmem:[#allocation2 + $0x50] sm:$0xff]
      %v1135 = vld [vmem:[#allocation2 + $0x58] sm:$0xff]
      %v1136 = vld [vmem:[#allocation2 + $0x60] sm:$0xff]
      %v1137 = vld [vmem:[#allocation2 + $0x68] sm:$0xff]
      %v1138 = vld [vmem:[#allocation2 + $0x70] sm:$0xff]
      %v1139 = vld [vmem:[#allocation2 + $0x78] sm:$0xff]
      %v1140 = vld [vmem:[#allocation2 + $0x80] sm:$0xff]
      %v1141 = vld [vmem:[#allocation2 + $0x88] sm:$0xff]
      %v1142 = vld [vmem:[#allocation2 + $0x90] sm:$0xff]
      %v1143 = vld [vmem:[#allocation2 + $0x98] sm:$0xff]
      %v1144 = vld [vmem:[#allocation2 + $0xa0] sm:$0xff]
      %v1145 = vld [vmem:[#allocation2 + $0xa8] sm:$0xff]
      %v1146 = vld [vmem:[#allocation2 + $0xb0] sm:$0xff]
      %v1147 = vld [vmem:[#allocation2 + $0xb8] sm:$0xff]
      %v1148 = vld [vmem:[#allocation2 + $0xc0] sm:$0xff]
      %v1149 = vld [vmem:[#allocation2 + $0xc8] sm:$0xff]
      %v1150 = vld [vmem:[#allocation2 + $0xd0] sm:$0xff]
      %v1151 = vld [vmem:[#allocation2 + $0xd8] sm:$0xff]
      %v1152 = vadd.f32 %v1124, %v1055
      %v1153 = vadd.f32 %v1125, %v1057
      %v1154 = vadd.f32 %v1126, %v1060
      %v1155 = vadd.f32 %v1127, %v1062
      %v1156 = vadd.f32 %v1128, %v1065
      %v1157 = vadd.f32 %v1129, %v1067
      %v1158 = vadd.f32 %v1130, %v1070
      %v1159 = vadd.f32 %v1131, %v1072
      %v1160 = vadd.f32 %v1132, %v1075
      %v1161 = vadd.f32 %v1133, %v1077
      %v1162 = vadd.f32 %v1134, %v1080
      %v1163 = vadd.f32 %v1135, %v1082
      %v1164 = vadd.f32 %v1136, %v1085
      %v1165 = vadd.f32 %v1137, %v1087
      %v1166 = vadd.f32 %v1138, %v1090
      %v1167 = vadd.f32 %v1139, %v1092
      %v1168 = vadd.f32 %v1140, %v1095
      %v1169 = vadd.f32 %v1141, %v1097
      %v1170 = vadd.f32 %v1142, %v1100
      %v1171 = vadd.f32 %v1143, %v1102
      %v1172 = vadd.f32 %v1144, %v1105
      %v1173 = vadd.f32 %v1145, %v1107
      %v1174 = vadd.f32 %v1146, %v1110
      %v1175 = vadd.f32 %v1147, %v1112
      %v1176 = vadd.f32 %v1148, %v1115
      %v1177 = vadd.f32 %v1149, %v1117
      %v1178 = vadd.f32 %v1150, %v1120
      %v1179 = vadd.f32 %v1151, %v1122
      %1180 = vst [vmem:[#allocation2] sm:$0xff] %v1152
      %1181 = vst [vmem:[#allocation2 + $0x8] sm:$0xff] %v1153
      %1182 = vst [vmem:[#allocation2 + $0x10] sm:$0xff] %v1154
      %1183 = vst [vmem:[#allocation2 + $0x18] sm:$0xff] %v1155
      %1184 = vst [vmem:[#allocation2 + $0x20] sm:$0xff] %v1156
      %1185 = vst [vmem:[#allocation2 + $0x28] sm:$0xff] %v1157
      %1186 = vst [vmem:[#allocation2 + $0x30] sm:$0xff] %v1158
      %1187 = vst [vmem:[#allocation2 + $0x38] sm:$0xff] %v1159
      %1188 = vst [vmem:[#allocation2 + $0x40] sm:$0xff] %v1160
      %1189 = vst [vmem:[#allocation2 + $0x48] sm:$0xff] %v1161
      %1190 = vst [vmem:[#allocation2 + $0x50] sm:$0xff] %v1162
      %1191 = vst [vmem:[#allocation2 + $0x58] sm:$0xff] %v1163
      %1192 = vst [vmem:[#allocation2 + $0x60] sm:$0xff] %v1164
      %1193 = vst [vmem:[#allocation2 + $0x68] sm:$0xff] %v1165
      %1194 = vst [vmem:[#allocation2 + $0x70] sm:$0xff] %v1166
      %1195 = vst [vmem:[#allocation2 + $0x78] sm:$0xff] %v1167
      %1196 = vst [vmem:[#allocation2 + $0x80] sm:$0xff] %v1168
      %1197 = vst [vmem:[#allocation2 + $0x88] sm:$0xff] %v1169
      %1198 = vst [vmem:[#allocation2 + $0x90] sm:$0xff] %v1170
      %1199 = vst [vmem:[#allocation2 + $0x98] sm:$0xff] %v1171
      %1200 = vst [vmem:[#allocation2 + $0xa0] sm:$0xff] %v1172
      %1201 = vst [vmem:[#allocation2 + $0xa8] sm:$0xff] %v1173
      %1202 = vst [vmem:[#allocation2 + $0xb0] sm:$0xff] %v1174
      %1203 = vst [vmem:[#allocation2 + $0xb8] sm:$0xff] %v1175
      %1204 = vst [vmem:[#allocation2 + $0xc0] sm:$0xff] %v1176
      %1205 = vst [vmem:[#allocation2 + $0xc8] sm:$0xff] %v1177
      %1206 = vst [vmem:[#allocation2 + $0xd0] sm:$0xff] %v1178
      %1207 = vst [vmem:[#allocation2 + $0xd8] sm:$0xff] %v1179
      %v1208 = vld [vmem:[#allocation2] sm:$0xff]
      %v1209 = vld [vmem:[#allocation2 + $0x8] sm:$0xff]
      %v1210 = vld [vmem:[#allocation2 + $0x10] sm:$0xff]
      %v1211 = vld [vmem:[#allocation2 + $0x18] sm:$0xff]
      %v1212 = vld [vmem:[#allocation2 + $0x20] sm:$0xff]
      %v1213 = vld [vmem:[#allocation2 + $0x28] sm:$0xff]
      %v1214 = vld [vmem:[#allocation2 + $0x30] sm:$0xff]
      %v1215 = vld [vmem:[#allocation2 + $0x38] sm:$0xff]
      %v1216 = vld [vmem:[#allocation2 + $0x40] sm:$0xff]
      %v1217 = vld [vmem:[#allocation2 + $0x48] sm:$0xff]
      %v1218 = vld [vmem:[#allocation2 + $0x50] sm:$0xff]
      %v1219 = vld [vmem:[#allocation2 + $0x58] sm:$0xff]
      %v1220 = vld [vmem:[#allocation2 + $0x60] sm:$0xff]
      %v1221 = vld [vmem:[#allocation2 + $0x68] sm:$0xff]
      %v1222 = vld [vmem:[#allocation2 + $0x70] sm:$0xff]
      %v1223 = vld [vmem:[#allocation2 + $0x78] sm:$0xff]
      %v1224 = vld [vmem:[#allocation2 + $0x80] sm:$0xff]
      %v1225 = vld [vmem:[#allocation2 + $0x88] sm:$0xff]
      %v1226 = vld [vmem:[#allocation2 + $0x90] sm:$0xff]
      %v1227 = vld [vmem:[#allocation2 + $0x98] sm:$0xff]
      %v1228 = vld [vmem:[#allocation2 + $0xa0] sm:$0xff]
      %v1229 = vld [vmem:[#allocation2 + $0xa8] sm:$0xff]
      %v1230 = vld [vmem:[#allocation2 + $0xb0] sm:$0xff]
      %v1231 = vld [vmem:[#allocation2 + $0xb8] sm:$0xff]
      %v1232 = vld [vmem:[#allocation2 + $0xc0] sm:$0xff]
      %v1233 = vld [vmem:[#allocation2 + $0xc8] sm:$0xff]
      %v1234 = vld [vmem:[#allocation2 + $0xd0] sm:$0xff]
      %v1235 = vld [vmem:[#allocation2 + $0xd8] sm:$0xff]
      %v1236 = vld [vmem:[%s6] sm:$0xff]
      %v1237 = vld [vmem:[%s6 + $0x8] sm:$0xff]
      %v1238 = vld [vmem:[%s6 + $0x10] sm:$0xff]
      %v1239 = vld [vmem:[%s6 + $0x18] sm:$0xff]
      %v1240 = vld [vmem:[%s6 + $0x20] sm:$0xff]
      %v1241 = vld [vmem:[%s6 + $0x28] sm:$0xff]
      %v1242 = vld [vmem:[%s6 + $0x30] sm:$0xff]
      %v1243 = vld [vmem:[%s6 + $0x38] sm:$0xff]
      %v1244 = vld [vmem:[%s6 + $0x40] sm:$0xff]
      %v1245 = vld [vmem:[%s6 + $0x48] sm:$0xff]
      %v1246 = vld [vmem:[%s6 + $0x50] sm:$0xff]
      %v1247 = vld [vmem:[%s6 + $0x58] sm:$0xff]
      %v1248 = vld [vmem:[%s6 + $0x60] sm:$0xff]
      %v1249 = vld [vmem:[%s6 + $0x68] sm:$0xff]
      %v1250 = vld [vmem:[%s6 + $0x70] sm:$0xff]
      %v1251 = vld [vmem:[%s6 + $0x78] sm:$0xff]
      %v1252 = vld [vmem:[%s6 + $0x80] sm:$0xff]
      %v1253 = vld [vmem:[%s6 + $0x88] sm:$0xff]
      %v1254 = vld [vmem:[%s6 + $0x90] sm:$0xff]
      %v1255 = vld [vmem:[%s6 + $0x98] sm:$0xff]
      %v1256 = vld [vmem:[%s6 + $0xa0] sm:$0xff]
      %v1257 = vld [vmem:[%s6 + $0xa8] sm:$0xff]
      %v1258 = vld [vmem:[%s6 + $0xb0] sm:$0xff]
      %v1259 = vld [vmem:[%s6 + $0xb8] sm:$0xff]
      %v1260 = vld [vmem:[%s6 + $0xc0] sm:$0xff]
      %v1261 = vld [vmem:[%s6 + $0xc8] sm:$0xff]
      %v1262 = vld [vmem:[%s6 + $0xd0] sm:$0xff]
      %v1263 = vld [vmem:[%s6 + $0xd8] sm:$0xff]
      %1265 = vset.pattern.permute.xlu0 0
      %1266 = vperm.xlu0 %1265, %v1236
      %v1267 = vpop.permute.xlu0 %1266
      %1270 = vset.pattern.permute.xlu0 0
      %1271 = vperm.xlu0 %1270, %v1237
      %v1272 = vpop.permute.xlu0 %1271
      %1275 = vset.pattern.permute.xlu0 0
      %1276 = vperm.xlu0 %1275, %v1238
      %v1277 = vpop.permute.xlu0 %1276
      %1280 = vset.pattern.permute.xlu0 0
      %1281 = vperm.xlu0 %1280, %v1239
      %v1282 = vpop.permute.xlu0 %1281
      %1285 = vset.pattern.permute.xlu0 0
      %1286 = vperm.xlu0 %1285, %v1240
      %v1287 = vpop.permute.xlu0 %1286
      %1290 = vset.pattern.permute.xlu0 0
      %1291 = vperm.xlu0 %1290, %v1241
      %v1292 = vpop.permute.xlu0 %1291
      %1295 = vset.pattern.permute.xlu0 0
      %1296 = vperm.xlu0 %1295, %v1242
      %v1297 = vpop.permute.xlu0 %1296
      %1300 = vset.pattern.permute.xlu0 0
      %1301 = vperm.xlu0 %1300, %v1243
      %v1302 = vpop.permute.xlu0 %1301
      %1305 = vset.pattern.permute.xlu0 0
      %1306 = vperm.xlu0 %1305, %v1244
      %v1307 = vpop.permute.xlu0 %1306
      %1310 = vset.pattern.permute.xlu0 0
      %1311 = vperm.xlu0 %1310, %v1245
      %v1312 = vpop.permute.xlu0 %1311
      %1315 = vset.pattern.permute.xlu0 0
      %1316 = vperm.xlu0 %1315, %v1246
      %v1317 = vpop.permute.xlu0 %1316
      %1320 = vset.pattern.permute.xlu0 0
      %1321 = vperm.xlu0 %1320, %v1247
      %v1322 = vpop.permute.xlu0 %1321
      %1325 = vset.pattern.permute.xlu0 0
      %1326 = vperm.xlu0 %1325, %v1248
      %v1327 = vpop.permute.xlu0 %1326
      %1330 = vset.pattern.permute.xlu0 0
      %1331 = vperm.xlu0 %1330, %v1249
      %v1332 = vpop.permute.xlu0 %1331
      %1335 = vset.pattern.permute.xlu0 0
      %1336 = vperm.xlu0 %1335, %v1250
      %v1337 = vpop.permute.xlu0 %1336
      %1340 = vset.pattern.permute.xlu0 0
      %1341 = vperm.xlu0 %1340, %v1251
      %v1342 = vpop.permute.xlu0 %1341
      %1345 = vset.pattern.permute.xlu0 0
      %1346 = vperm.xlu0 %1345, %v1252
      %v1347 = vpop.permute.xlu0 %1346
      %1350 = vset.pattern.permute.xlu0 0
      %1351 = vperm.xlu0 %1350, %v1253
      %v1352 = vpop.permute.xlu0 %1351
      %1355 = vset.pattern.permute.xlu0 0
      %1356 = vperm.xlu0 %1355, %v1254
      %v1357 = vpop.permute.xlu0 %1356
      %1360 = vset.pattern.permute.xlu0 0
      %1361 = vperm.xlu0 %1360, %v1255
      %v1362 = vpop.permute.xlu0 %1361
      %1365 = vset.pattern.permute.xlu0 0
      %1366 = vperm.xlu0 %1365, %v1256
      %v1367 = vpop.permute.xlu0 %1366
      %1370 = vset.pattern.permute.xlu0 0
      %1371 = vperm.xlu0 %1370, %v1257
      %v1372 = vpop.permute.xlu0 %1371
      %1375 = vset.pattern.permute.xlu0 0
      %1376 = vperm.xlu0 %1375, %v1258
      %v1377 = vpop.permute.xlu0 %1376
      %1380 = vset.pattern.permute.xlu0 0
      %1381 = vperm.xlu0 %1380, %v1259
      %v1382 = vpop.permute.xlu0 %1381
      %1385 = vset.pattern.permute.xlu0 0
      %1386 = vperm.xlu0 %1385, %v1260
      %v1387 = vpop.permute.xlu0 %1386
      %1390 = vset.pattern.permute.xlu0 0
      %1391 = vperm.xlu0 %1390, %v1261
      %v1392 = vpop.permute.xlu0 %1391
      %1395 = vset.pattern.permute.xlu0 0
      %1396 = vperm.xlu0 %1395, %v1262
      %v1397 = vpop.permute.xlu0 %1396
      %1400 = vset.pattern.permute.xlu0 0
      %1401 = vperm.xlu0 %1400, %v1263
      %v1402 = vpop.permute.xlu0 %1401
      %v1404 = vmul.f32 %v1208, %v1267
      %v1405 = vmul.f32 %v1209, %v1272
      %v1406 = vmul.f32 %v1210, %v1277
      %v1407 = vmul.f32 %v1211, %v1282
      %v1408 = vmul.f32 %v1212, %v1287
      %v1409 = vmul.f32 %v1213, %v1292
      %v1410 = vmul.f32 %v1214, %v1297
      %v1411 = vmul.f32 %v1215, %v1302
      %v1412 = vmul.f32 %v1216, %v1307
      %v1413 = vmul.f32 %v1217, %v1312
      %v1414 = vmul.f32 %v1218, %v1317
      %v1415 = vmul.f32 %v1219, %v1322
      %v1416 = vmul.f32 %v1220, %v1327
      %v1417 = vmul.f32 %v1221, %v1332
      %v1418 = vmul.f32 %v1222, %v1337
      %v1419 = vmul.f32 %v1223, %v1342
      %v1420 = vmul.f32 %v1224, %v1347
      %v1421 = vmul.f32 %v1225, %v1352
      %v1422 = vmul.f32 %v1226, %v1357
      %v1423 = vmul.f32 %v1227, %v1362
      %v1424 = vmul.f32 %v1228, %v1367
      %v1425 = vmul.f32 %v1229, %v1372
      %v1426 = vmul.f32 %v1230, %v1377
      %v1427 = vmul.f32 %v1231, %v1382
      %v1428 = vmul.f32 %v1232, %v1387
      %v1429 = vmul.f32 %v1233, %v1392
      %v1430 = vmul.f32 %v1234, %v1397
      %v1431 = vmul.f32 %v1235, %v1402
      %v1432 = vadd.f32 %v1404, %v1405
      %v1433 = vadd.f32 %v1432, %v1406
      %v1434 = vadd.f32 %v1433, %v1407
      %v1435 = vadd.f32 %v1434, %v1408
      %v1436 = vadd.f32 %v1435, %v1409
      %v1437 = vadd.f32 %v1436, %v1410
      %v1438 = vadd.f32 %v1437, %v1411
      %v1439 = vadd.f32 %v1438, %v1412
      %v1440 = vadd.f32 %v1439, %v1413
      %v1441 = vadd.f32 %v1440, %v1414
      %v1442 = vadd.f32 %v1441, %v1415
      %v1443 = vadd.f32 %v1442, %v1416
      %v1444 = vadd.f32 %v1443, %v1417
      %v1445 = vadd.f32 %v1444, %v1418
      %v1446 = vadd.f32 %v1445, %v1419
      %v1447 = vadd.f32 %v1446, %v1420
      %v1448 = vadd.f32 %v1447, %v1421
      %v1449 = vadd.f32 %v1448, %v1422
      %v1450 = vadd.f32 %v1449, %v1423
      %v1451 = vadd.f32 %v1450, %v1424
      %v1452 = vadd.f32 %v1451, %v1425
      %v1453 = vadd.f32 %v1452, %v1426
      %v1454 = vadd.f32 %v1453, %v1427
      %v1455 = vadd.f32 %v1454, %v1428
      %v1456 = vadd.f32 %v1455, %v1429
      %v1457 = vadd.f32 %v1456, %v1430
      %v1458 = vadd.f32 %v1457, %v1431
      %v1459 = vrot.slane %v1458, 4
      %v1460 = vadd.f32 %v1458, %v1459
      %v1461 = vrot.slane %v1460, 2
      %v1462 = vadd.f32 %v1460, %v1461
      %v1463 = vrot.slane %v1462, 1
      %v1464 = vadd.f32 %v1462, %v1463
      %v1465 = vmul.f32 %v1404, %v1404
      %v1466 = vmul.f32 %v1405, %v1405
      %v1467 = vmul.f32 %v1406, %v1406
      %v1468 = vmul.f32 %v1407, %v1407
      %v1469 = vmul.f32 %v1408, %v1408
      %v1470 = vmul.f32 %v1409, %v1409
      %v1471 = vmul.f32 %v1410, %v1410
      %v1472 = vmul.f32 %v1411, %v1411
      %v1473 = vmul.f32 %v1412, %v1412
      %v1474 = vmul.f32 %v1413, %v1413
      %v1475 = vmul.f32 %v1414, %v1414
      %v1476 = vmul.f32 %v1415, %v1415
      %v1477 = vmul.f32 %v1416, %v1416
      %v1478 = vmul.f32 %v1417, %v1417
      %v1479 = vmul.f32 %v1418, %v1418
      %v1480 = vmul.f32 %v1419, %v1419
      %v1481 = vmul.f32 %v1420, %v1420
      %v1482 = vmul.f32 %v1421, %v1421
      %v1483 = vmul.f32 %v1422, %v1422
      %v1484 = vmul.f32 %v1423, %v1423
      %v1485 = vmul.f32 %v1424, %v1424
      %v1486 = vmul.f32 %v1425, %v1425
      %v1487 = vmul.f32 %v1426, %v1426
      %v1488 = vmul.f32 %v1427, %v1427
      %v1489 = vmul.f32 %v1428, %v1428
      %v1490 = vmul.f32 %v1429, %v1429
      %v1491 = vmul.f32 %v1430, %v1430
      %v1492 = vmul.f32 %v1431, %v1431
      %v1493 = vadd.f32 %v1465, %v1466
      %v1494 = vadd.f32 %v1493, %v1467
      %v1495 = vadd.f32 %v1494, %v1468
      %v1496 = vadd.f32 %v1495, %v1469
      %v1497 = vadd.f32 %v1496, %v1470
      %v1498 = vadd.f32 %v1497, %v1471
      %v1499 = vadd.f32 %v1498, %v1472
      %v1500 = vadd.f32 %v1499, %v1473
      %v1501 = vadd.f32 %v1500, %v1474
      %v1502 = vadd.f32 %v1501, %v1475
      %v1503 = vadd.f32 %v1502, %v1476
      %v1504 = vadd.f32 %v1503, %v1477
      %v1505 = vadd.f32 %v1504, %v1478
      %v1506 = vadd.f32 %v1505, %v1479
      %v1507 = vadd.f32 %v1506, %v1480
      %v1508 = vadd.f32 %v1507, %v1481
      %v1509 = vadd.f32 %v1508, %v1482
      %v1510 = vadd.f32 %v1509, %v1483
      %v1511 = vadd.f32 %v1510, %v1484
      %v1512 = vadd.f32 %v1511, %v1485
      %v1513 = vadd.f32 %v1512, %v1486
      %v1514 = vadd.f32 %v1513, %v1487
      %v1515 = vadd.f32 %v1514, %v1488
      %v1516 = vadd.f32 %v1515, %v1489
      %v1517 = vadd.f32 %v1516, %v1490
      %v1518 = vadd.f32 %v1517, %v1491
      %v1519 = vadd.f32 %v1518, %v1492
      %v1520 = vrot.slane %v1519, 4
      %v1521 = vadd.f32 %v1519, %v1520
      %v1522 = vrot.slane %v1521, 2
      %v1523 = vadd.f32 %v1521, %v1522
      %v1524 = vrot.slane %v1523, 1
      %v1525 = vadd.f32 %v1523, %v1524
      %vm1526 = vcmask 1040384
      %v1527 = vsel %vm1526, %v1464, %v1525
      %v1528 = vld [vmem:[%s4] sm:$0xff]
      %v1529 = vld [vmem:[%s4 + $0x8] sm:$0xff]
      %v1530 = vld [vmem:[%s4 + $0x10] sm:$0xff]
      %v1531 = vld [vmem:[%s4 + $0x18] sm:$0xff]
      %v1532 = vld [vmem:[%s4 + $0x20] sm:$0xff]
      %v1533 = vld [vmem:[%s4 + $0x28] sm:$0xff]
      %v1534 = vld [vmem:[%s4 + $0x30] sm:$0xff]
      %v1535 = vld [vmem:[%s4 + $0x38] sm:$0xff]
      %v1536 = vld [vmem:[%s4 + $0x40] sm:$0xff]
      %v1537 = vld [vmem:[%s4 + $0x48] sm:$0xff]
      %v1538 = vld [vmem:[%s4 + $0x50] sm:$0xff]
      %v1539 = vld [vmem:[%s4 + $0x58] sm:$0xff]
      %v1540 = vld [vmem:[%s4 + $0x60] sm:$0xff]
      %v1541 = vld [vmem:[%s4 + $0x68] sm:$0xff]
      %v1542 = vld [vmem:[%s4 + $0x70] sm:$0xff]
      %v1543 = vld [vmem:[%s4 + $0x78] sm:$0xff]
      %1544 = vmatpush.msra.mxu0 %v1543
      %1545 = vmatpush.msra.mxu0 %v1542
      %1546 = vmatpush.msra.mxu0 %v1541
      %1547 = vmatpush.msra.mxu0 %v1540
      %1548 = vmatpush.msra.mxu0 %v1539
      %1549 = vmatpush.msra.mxu0 %v1538
      %1550 = vmatpush.msra.mxu0 %v1537
      %1551 = vmatpush.msra.mxu0 %v1536
      %1552 = vmatpush.msra.mxu0 %v1535
      %1553 = vmatpush.msra.mxu0 %v1534
      %1554 = vmatpush.msra.mxu0 %v1533
      %1555 = vmatpush.msra.mxu0 %v1532
      %1556 = vmatpush.msra.mxu0 %v1531
      %1557 = vmatpush.msra.mxu0 %v1530
      %1558 = vmatpush.msra.mxu0 %v1529
      %1559 = vmatpush.msra.mxu0 %v1528
      %1560 = vmatmul.f32.gmra.mxu0 %v1527
      %v1561 = vpop.f32.mrf.mxu0
      %v1562 = vadd.f32 0.0, %v1561
      %1563 = vdwg.mxu0
      %v1564 = vld [vmem:[%s5] sm:$0xf]
      %vm1565 = vcmask 31744
      %v1567 = vsel %vm1565, %v1562, 0
      %vm1569 = vcmask 1043456
      %v1571 = vsel %vm1569, %v1564, 0
      %1573 = vmatpush.msra.mxu0 0.0
      %1574 = vmatpush.msra.mxu0 0.0
      %1575 = vmatpush.msra.mxu0 0.0
      %1576 = vmatpush.msra.mxu0 0.0
      %1577 = vmatpush.msra.mxu0 0.0
      %1578 = vmatpush.msra.mxu0 0.0
      %1579 = vmatpush.msra.mxu0 0.0
      %1580 = vmatpush.msra.mxu0 0.0
      %1581 = vmatpush.msra.mxu0 0.0
      %1582 = vmatpush.msra.mxu0 0.0
      %1583 = vmatpush.msra.mxu0 0.0
      %1584 = vmatpush.msra.mxu0 0.0
      %1585 = vmatpush.msra.mxu0 0.0
      %1586 = vmatpush.msra.mxu0 0.0
      %1587 = vmatpush.msra.mxu0 0.0
      %1588 = vmatpush.msra.mxu0 %v1571
      %1589 = vmatmul.f32.gmra.mxu0 %v1567
      %v1590 = vpop.f32.mrf.mxu0
      %v1591 = vadd.f32 0.0, %v1590
      %1592 = vdwg.mxu0
      %v1593 = vmul.f32 %v1591, 0.0025510204
      %v1594 = vmul.f32 %v1593, %v1593
      %v1596 = vrot.slane %v1594, 7
      %v1598 = vsub.f32 %v1593, %v1596
      %v1599 = vmax.f32 %v1598, 0.0
      %v1600 = vadd.f32 %v1599, 1e-05
      %v1601 = vrsqrt.pop %v1600
      %v1602 = vmul.f32 %v1601, %v1600
      %v1603 = vmul.f32 %v1602, %v1601
      %v1604 = vmul.f32 0.5, %v1603
      %v1605 = vsub.f32 1.5, %v1604
      %v1606 = vmul.f32 %v1601, %v1605
      %vm1607 = vweird.f32 %v1600
      %vm1608 = vweird.f32 %v1601
      %vm1609 = vmor %vm1607, %vm1608
      %v1610 = vsel %vm1609, %v1601, %v1606
      %v1611 = vperm.slane %v1593, 0
      %v1612 = vsub.f32 %v1208, %v1611
      %v1613 = vsub.f32 %v1209, %v1611
      %v1614 = vsub.f32 %v1210, %v1611
      %v1615 = vsub.f32 %v1211, %v1611
      %v1616 = vsub.f32 %v1212, %v1611
      %v1617 = vsub.f32 %v1213, %v1611
      %v1618 = vsub.f32 %v1214, %v1611
      %v1619 = vsub.f32 %v1215, %v1611
      %v1620 = vsub.f32 %v1216, %v1611
      %v1621 = vsub.f32 %v1217, %v1611
      %v1622 = vsub.f32 %v1218, %v1611
      %v1623 = vsub.f32 %v1219, %v1611
      %v1624 = vsub.f32 %v1220, %v1611
      %v1625 = vsub.f32 %v1221, %v1611
      %v1626 = vsub.f32 %v1222, %v1611
      %v1627 = vsub.f32 %v1223, %v1611
      %v1628 = vsub.f32 %v1224, %v1611
      %v1629 = vsub.f32 %v1225, %v1611
      %v1630 = vsub.f32 %v1226, %v1611
      %v1631 = vsub.f32 %v1227, %v1611
      %v1632 = vsub.f32 %v1228, %v1611
      %v1633 = vsub.f32 %v1229, %v1611
      %v1634 = vsub.f32 %v1230, %v1611
      %v1635 = vsub.f32 %v1231, %v1611
      %v1636 = vsub.f32 %v1232, %v1611
      %v1637 = vsub.f32 %v1233, %v1611
      %v1638 = vsub.f32 %v1234, %v1611
      %v1639 = vsub.f32 %v1235, %v1611
      %v1640 = vld [vmem:[%s2] sm:$0x1]
      %v1642 = vperm.slane %v1640, 0
      %v1644 = vmul.f32 %v1610, %v1642
      %v1645 = vperm.slane %v1644, 1
      %v1646 = vmul.f32 %v1612, %v1645
      %v1647 = vmul.f32 %v1613, %v1645
      %v1648 = vmul.f32 %v1614, %v1645
      %v1649 = vmul.f32 %v1615, %v1645
      %v1650 = vmul.f32 %v1616, %v1645
      %v1651 = vmul.f32 %v1617, %v1645
      %v1652 = vmul.f32 %v1618, %v1645
      %v1653 = vmul.f32 %v1619, %v1645
      %v1654 = vmul.f32 %v1620, %v1645
      %v1655 = vmul.f32 %v1621, %v1645
      %v1656 = vmul.f32 %v1622, %v1645
      %v1657 = vmul.f32 %v1623, %v1645
      %v1658 = vmul.f32 %v1624, %v1645
      %v1659 = vmul.f32 %v1625, %v1645
      %v1660 = vmul.f32 %v1626, %v1645
      %v1661 = vmul.f32 %v1627, %v1645
      %v1662 = vmul.f32 %v1628, %v1645
      %v1663 = vmul.f32 %v1629, %v1645
      %v1664 = vmul.f32 %v1630, %v1645
      %v1665 = vmul.f32 %v1631, %v1645
      %v1666 = vmul.f32 %v1632, %v1645
      %v1667 = vmul.f32 %v1633, %v1645
      %v1668 = vmul.f32 %v1634, %v1645
      %v1669 = vmul.f32 %v1635, %v1645
      %v1670 = vmul.f32 %v1636, %v1645
      %v1671 = vmul.f32 %v1637, %v1645
      %v1672 = vmul.f32 %v1638, %v1645
      %v1673 = vmul.f32 %v1639, %v1645
      %v1674 = vld [vmem:[%s3] sm:$0x1]
      %v1676 = vperm.slane %v1674, 0
      %v1678 = vadd.f32 %v1646, %v1676
      %v1679 = vadd.f32 %v1647, %v1676
      %v1680 = vadd.f32 %v1648, %v1676
      %v1681 = vadd.f32 %v1649, %v1676
      %v1682 = vadd.f32 %v1650, %v1676
      %v1683 = vadd.f32 %v1651, %v1676
      %v1684 = vadd.f32 %v1652, %v1676
      %v1685 = vadd.f32 %v1653, %v1676
      %v1686 = vadd.f32 %v1654, %v1676
      %v1687 = vadd.f32 %v1655, %v1676
      %v1688 = vadd.f32 %v1656, %v1676
      %v1689 = vadd.f32 %v1657, %v1676
      %v1690 = vadd.f32 %v1658, %v1676
      %v1691 = vadd.f32 %v1659, %v1676
      %v1692 = vadd.f32 %v1660, %v1676
      %v1693 = vadd.f32 %v1661, %v1676
      %v1694 = vadd.f32 %v1662, %v1676
      %v1695 = vadd.f32 %v1663, %v1676
      %v1696 = vadd.f32 %v1664, %v1676
      %v1697 = vadd.f32 %v1665, %v1676
      %v1698 = vadd.f32 %v1666, %v1676
      %v1699 = vadd.f32 %v1667, %v1676
      %v1700 = vadd.f32 %v1668, %v1676
      %v1701 = vadd.f32 %v1669, %v1676
      %v1702 = vadd.f32 %v1670, %v1676
      %v1703 = vadd.f32 %v1671, %v1676
      %v1704 = vadd.f32 %v1672, %v1676
      %v1705 = vadd.f32 %v1673, %v1676
      %v1706 = vmax.f32 %v1678, 0.0
      %v1707 = vmax.f32 %v1679, 0.0
      %v1708 = vmax.f32 %v1680, 0.0
      %v1709 = vmax.f32 %v1681, 0.0
      %v1710 = vmax.f32 %v1682, 0.0
      %v1711 = vmax.f32 %v1683, 0.0
      %v1712 = vmax.f32 %v1684, 0.0
      %v1713 = vmax.f32 %v1685, 0.0
      %v1714 = vmax.f32 %v1686, 0.0
      %v1715 = vmax.f32 %v1687, 0.0
      %v1716 = vmax.f32 %v1688, 0.0
      %v1717 = vmax.f32 %v1689, 0.0
      %v1718 = vmax.f32 %v1690, 0.0
      %v1719 = vmax.f32 %v1691, 0.0
      %v1720 = vmax.f32 %v1692, 0.0
      %v1721 = vmax.f32 %v1693, 0.0
      %v1722 = vmax.f32 %v1694, 0.0
      %v1723 = vmax.f32 %v1695, 0.0
      %v1724 = vmax.f32 %v1696, 0.0
      %v1725 = vmax.f32 %v1697, 0.0
      %v1726 = vmax.f32 %v1698, 0.0
      %v1727 = vmax.f32 %v1699, 0.0
      %v1728 = vmax.f32 %v1700, 0.0
      %v1729 = vmax.f32 %v1701, 0.0
      %v1730 = vmax.f32 %v1702, 0.0
      %v1731 = vmax.f32 %v1703, 0.0
      %v1732 = vmax.f32 %v1704, 0.0
      %v1733 = vmax.f32 %v1705, 0.0
      %1734 = vst [vmem:[%s278] sm:$0xff] %v1706
      %1735 = vst [vmem:[%s278 + $0x8] sm:$0xff] %v1707
      %1736 = vst [vmem:[%s278 + $0x10] sm:$0xff] %v1708
      %1737 = vst [vmem:[%s278 + $0x18] sm:$0xff] %v1709
      %1738 = vst [vmem:[%s278 + $0x20] sm:$0xff] %v1710
      %1739 = vst [vmem:[%s278 + $0x28] sm:$0xff] %v1711
      %1740 = vst [vmem:[%s278 + $0x30] sm:$0xff] %v1712
      %1741 = vst [vmem:[%s278 + $0x38] sm:$0xff] %v1713
      %1742 = vst [vmem:[%s278 + $0x40] sm:$0xff] %v1714
      %1743 = vst [vmem:[%s278 + $0x48] sm:$0xff] %v1715
      %1744 = vst [vmem:[%s278 + $0x50] sm:$0xff] %v1716
      %1745 = vst [vmem:[%s278 + $0x58] sm:$0xff] %v1717
      %1746 = vst [vmem:[%s278 + $0x60] sm:$0xff] %v1718
      %1747 = vst [vmem:[%s278 + $0x68] sm:$0xff] %v1719
      %1748 = vst [vmem:[%s278 + $0x70] sm:$0xff] %v1720
      %1749 = vst [vmem:[%s278 + $0x78] sm:$0xff] %v1721
      %1750 = vst [vmem:[%s278 + $0x80] sm:$0xff] %v1722
      %1751 = vst [vmem:[%s278 + $0x88] sm:$0xff] %v1723
      %1752 = vst [vmem:[%s278 + $0x90] sm:$0xff] %v1724
      %1753 = vst [vmem:[%s278 + $0x98] sm:$0xff] %v1725
      %1754 = vst [vmem:[%s278 + $0xa0] sm:$0xff] %v1726
      %1755 = vst [vmem:[%s278 + $0xa8] sm:$0xff] %v1727
      %1756 = vst [vmem:[%s278 + $0xb0] sm:$0xff] %v1728
      %1757 = vst [vmem:[%s278 + $0xb8] sm:$0xff] %v1729
      %1758 = vst [vmem:[%s278 + $0xc0] sm:$0xff] %v1730
      %1759 = vst [vmem:[%s278 + $0xc8] sm:$0xff] %v1731
      %1760 = vst [vmem:[%s278 + $0xd0] sm:$0xff] %v1732
      %1761 = vst [vmem:[%s278 + $0xd8] sm:$0xff] %v1733
      %p1762 = scmp.lt.s32.totalorder %s18, 1
      %s1763 = scalar_select %p1762, %s18, 1
      %s1764 = smul.addr %s1763, 28
      %s1765 = smul.addr %s1764, 8
      %s1766 = scalar_lea.vmem %s7, %s1765
      // Predicated region
      $region49: #{conv2d_module_forward.1} parent=47 // pred_check
        %p1767 = pneg %p188
      $region50: #{conv2d_module_forward.1} parent=47 // pred_check_branch
        %1769 = sbr.rel (%p1767) target = $region52
      $region51: #{conv2d_module_forward.1} parent=47 // pred_region
        _
      $region52: #{conv2d_module_forward.1} parent=47 // pred_fallthru
        _
    $region48: #{conv2d_module_forward.1} parent=5 // pred_fallthru
      _
    %p1770 = scmp.le.s32.totalorder 2, %s13
    // Predicated region
    $region53: #{conv2d_module_forward.1} parent=5 // pred_check
      %p1771 = pneg %p1770
    $region54: #{conv2d_module_forward.1} parent=5 // pred_check_branch
      %1773 = sbr.rel (%p1771) target = $region56
    $region55: #{conv2d_module_forward.1} parent=5 // pred_region
      %s1774 = ssub.s32 %s13, 2
      // Predicated region
      $region57: #{conv2d_module_forward.1} parent=55 // pred_check
        %p1775 = pneg %p194
      $region58: #{conv2d_module_forward.1} parent=55 // pred_check_branch
        %1777 = sbr.rel (%p1775) target = $region60
      $region59: #{conv2d_module_forward.1} parent=55 // pred_region
        %p1778 = scmp.lt.s32.totalorder %s19, 1
        %s1779 = scalar_select %p1778, %s19, 1
        %s1780 = smul.addr %s1779, 28
        %s1781 = smul.addr %s1780, 8
        %s1782 = scalar_lea.vmem %s7, %s1781
      $region60: #{conv2d_module_forward.1} parent=55 // pred_fallthru
        _
    $region56: #{conv2d_module_forward.1} parent=5 // pred_fallthru
      _
  $region6: #{conv2d_module_forward.1} parent=0 // loop_footer
    %s17 = sadd.s32 1, %s13
  $region7: #{conv2d_module_forward.1} parent=0 // loop_footer_branch
    %12 = sbr.rel target = $region3
  $region8: #{conv2d_module_forward.1} parent=0 // loop_exit
    _

</llo_original>
